<compile_context>
chip_gen: v5e
topology: v5e:2x2
jax: 0.10.0
libtpu: 0.0.40
codegen_flags: <defaults>
</compile_context>

<pallas_src>
import jax
import jax.numpy as jnp
from jax.experimental import pallas as pl
from jax.experimental.pallas import tpu as pltpu

IN_FEATURES = 85
HIDDEN = 512
NUM_CLASSES = 10
N_PAD = 128        # logits lanes padded 10 -> 128: dense, unmasked stores


def _round_up(x: int, m: int) -> int:
    return (x + m - 1) // m * m


def _choose_tile(batch: int, tm: int) -> int:
    """Pick the batch-tile row count.

    - small batch: one tile, rounded to 16 rows (bf16 sublane granularity);
    - large batch: multiple of 256 (MXU-M on v6e/v7x, also multiple of 128 for
      v5e), capped at `tm`;
    - batch >= 512: force >= 2 grid steps so v7x megacore can split the
      "parallel" batch axis across both TensorCores.
    """
    if batch <= 256:
        return max(16, _round_up(batch, 16))
    t = min(tm, _round_up(batch, 256))
    if batch >= 512 and pl.cdiv(batch, t) < 2:
        t = max(256, _round_up(pl.cdiv(batch, 2), 256))
    return t


def _mlp_kernel(x_ref, w1_ref, b1_ref, w2_ref, b2_ref, w3_ref, b3_ref, o_ref):
    """Fused Linear->ReLU->Linear->ReLU->Linear for one (TM, 85) batch tile.

    bf16 operands into the MXU (f32 accumulation); bias add + ReLU run in f32
    on the VPU underneath the matmuls.  Weights are VMEM-resident (constant
    index_maps); only x / out tiles stream per grid step.
    """
    x = x_ref[...].astype(jnp.bfloat16)                               # (TM, 85)
    h1 = jnp.dot(x, w1_ref[...], preferred_element_type=jnp.float32) + b1_ref[...]
    h1 = jnp.maximum(h1, 0.0).astype(jnp.bfloat16)                    # (TM, 512)
    h2 = jnp.dot(h1, w2_ref[...], preferred_element_type=jnp.float32) + b2_ref[...]
    h2 = jnp.maximum(h2, 0.0).astype(jnp.bfloat16)                    # (TM, 512)
    out = jnp.dot(h2, w3_ref[...], preferred_element_type=jnp.float32) + b3_ref[...]
    o_ref[...] = out.astype(o_ref.dtype)                              # (TM, 128) bf16


def pack_params(params):
    """Pad/cast PyTorch-style f32 params into kernel layout (done once)."""
    w1, b1, w2, b2, w3, b3 = params
    num_classes = w3.shape[1]
    w3p = jnp.zeros((HIDDEN, N_PAD), jnp.float32).at[:, :num_classes].set(w3)
    b3p = jnp.zeros((1, N_PAD), jnp.float32).at[:, :num_classes].set(b3)
    return (
        w1.astype(jnp.bfloat16),       # (85, 512)  -- K stays 85, no lane pad
        b1.astype(jnp.float32),        # (1, 512)
        w2.astype(jnp.bfloat16),       # (512, 512)
        b2.astype(jnp.float32),        # (1, 512)
        w3p.astype(jnp.bfloat16),      # (512, 128)
        b3p,                           # (1, 128) f32
        num_classes,
    )


def linear_net_forward(x, packed, *, tm: int = 512):
    """x: (B, 1, 85) float32 -> logits (B, num_classes), matching
    LinearNet.forward (linear_relu_stack + squeeze(1))."""
    w1, b1, w2, b2, w3, b3, num_classes = packed
    B = x.shape[0]
    x2d = x.reshape(B, IN_FEATURES)            # free view; stays f32, cast in-kernel

    tm_eff = _choose_tile(B, tm)
    grid = (pl.cdiv(B, tm_eff),)
    b_pad = grid[0] * tm_eff                    # output rows padded to full tiles

    const = lambda i: (0, 0)

    flops = 2 * B * (IN_FEATURES * HIDDEN + HIDDEN * HIDDEN + HIDDEN * N_PAD)
    bytes_accessed = (
        B * IN_FEATURES * 4 + b_pad * N_PAD * 2            # x in (f32), logits out (bf16)
        + (w1.size + w2.size + w3.size) * 2                # bf16 weights (read once)
        + (b1.size + b2.size + b3.size) * 4                # f32 biases
    )

    out = pl.pallas_call(
        _mlp_kernel,
        out_shape=jax.ShapeDtypeStruct((b_pad, N_PAD), jnp.bfloat16),
        grid=grid,
        in_specs=[
            pl.BlockSpec((tm_eff, IN_FEATURES), lambda i: (i, 0)),  # x: streamed
            pl.BlockSpec((IN_FEATURES, HIDDEN), const),             # W1: resident
            pl.BlockSpec((1, HIDDEN), const),                       # b1: resident
            pl.BlockSpec((HIDDEN, HIDDEN), const),                  # W2: resident
            pl.BlockSpec((1, HIDDEN), const),                       # b2: resident
            pl.BlockSpec((HIDDEN, N_PAD), const),                   # W3: resident
            pl.BlockSpec((1, N_PAD), const),                        # b3: resident
        ],
        out_specs=pl.BlockSpec((tm_eff, N_PAD), lambda i: (i, 0)),
        compiler_params=pltpu.CompilerParams(
            dimension_semantics=("parallel",),      # megacore shard on v7x
            vmem_limit_bytes=32 * 1024 * 1024,
        ),
        cost_estimate=pl.CostEstimate(
            flops=flops, transcendentals=0, bytes_accessed=bytes_accessed
        ),
    )(x2d, w1, b1, w2, b2, w3, b3)

    # Padded rows / lanes are don't-care; slice valid logits, keep f32 interface.
    return out[:B, :num_classes].astype(jnp.float32)


def init_params(key, num_classes):
    """Deterministic synthetic init (nn.Linear-shaped weights, stored
    transposed so the math is x @ W)."""
    k1, k2, k3, k4, k5, k6 = jax.random.split(key, 6)

    def lin(kw, kb, fan_in, fan_out):
        bound = 1.0 / jnp.sqrt(fan_in)
        w = jax.random.uniform(kw, (fan_in, fan_out), jnp.float32, -bound, bound)
        b = jax.random.uniform(kb, (1, fan_out), jnp.float32, -bound, bound)
        return w, b

    w1, b1 = lin(k1, k2, IN_FEATURES, HIDDEN)
    w2, b2 = lin(k3, k4, HIDDEN, HIDDEN)
    w3, b3 = lin(k5, k6, HIDDEN, num_classes)
    return (w1, b1, w2, b2, w3, b3)


def reference_forward(x, params):
    """Pure-JAX f32 reference matching the PyTorch module."""
    w1, b1, w2, b2, w3, b3 = params
    h = x.reshape(x.shape[0], IN_FEATURES)
    h = jnp.maximum(h @ w1 + b1, 0.0)
    h = jnp.maximum(h @ w2 + b2, 0.0)
    return h @ w3 + b3


if __name__ == "__main__":
    key = jax.random.PRNGKey(0)
    kx, kx2, kx3, kp = jax.random.split(key, 4)

    params = init_params(kp, NUM_CLASSES)
    packed = pack_params(params)

    # bf16 MXU inputs + bf16 logits writeback -> compare against f32 ref with a
    # modest tolerance.
    TOL = dict(atol=5e-2, rtol=5e-2)

    # Small batch: single small tile (16 rows), grid=(1,).
    B = 8
    x = jax.random.normal(kx, (B, 1, IN_FEATURES), dtype=jnp.float32)
    logits = jax.block_until_ready(linear_net_forward(x, packed))
    ref = reference_forward(x, params)
    assert logits.shape == (B, NUM_CLASSES), logits.shape
    assert jnp.allclose(logits, ref, **TOL), "mismatch vs reference (B=8)"

    # Non-multiple batch: exercises the partial-block / padded-output path.
    B2 = 260
    x2 = jax.random.normal(kx2, (B2, 1, IN_FEATURES), dtype=jnp.float32)
    logits2 = jax.block_until_ready(linear_net_forward(x2, packed))
    ref2 = reference_forward(x2, params)
    assert logits2.shape == (B2, NUM_CLASSES), logits2.shape
    assert jnp.allclose(logits2, ref2, **TOL), "mismatch vs reference (B=260)"

    # Larger batch: multi-step grid (>= 2 steps, v7x megacore path) + ragged tail.
    B3 = 1030
    x3 = jax.random.normal(kx3, (B3, 1, IN_FEATURES), dtype=jnp.float32)
    logits3 = jax.block_until_ready(linear_net_forward(x3, packed))
    ref3 = reference_forward(x3, params)
    assert logits3.shape == (B3, NUM_CLASSES), logits3.shape
    assert jnp.allclose(logits3, ref3, **TOL), "mismatch vs reference (B=1030)"

    print("KERNEL_OK")
</pallas_src>

<mosaic_0001>
module attributes {stable_mosaic.version = 11 : i64} {
  func.func @_mlp_kernel(%arg0: i32, %arg1: memref<16x85xf32, #tpu.memory_space<vmem>>, %arg2: memref<85x512xbf16, #tpu.memory_space<vmem>>, %arg3: memref<1x512xf32, #tpu.memory_space<vmem>>, %arg4: memref<512x512xbf16, #tpu.memory_space<vmem>>, %arg5: memref<1x512xf32, #tpu.memory_space<vmem>>, %arg6: memref<512x128xbf16, #tpu.memory_space<vmem>>, %arg7: memref<1x128xf32, #tpu.memory_space<vmem>>, %arg8: memref<16x128xbf16, #tpu.memory_space<vmem>>) attributes {dimension_semantics = [#tpu.dimension_semantics<parallel>], iteration_bounds = array<i64: 1>, scalar_prefetch = 0 : i64, scratch_operands = 0 : i64, tpu.core_type = #tpu.core_type<tc>, window_params = [{transform_indices = @transform_0, window_bounds = array<i64: 16, 85>}, {pipeline_mode = #tpu.pipeline_mode<synchronous>, transform_indices = @transform_1, window_bounds = array<i64: 85, 512>}, {pipeline_mode = #tpu.pipeline_mode<synchronous>, transform_indices = @transform_2, window_bounds = array<i64: 1, 512>}, {pipeline_mode = #tpu.pipeline_mode<synchronous>, transform_indices = @transform_3, window_bounds = array<i64: 512, 512>}, {pipeline_mode = #tpu.pipeline_mode<synchronous>, transform_indices = @transform_4, window_bounds = array<i64: 1, 512>}, {pipeline_mode = #tpu.pipeline_mode<synchronous>, transform_indices = @transform_5, window_bounds = array<i64: 512, 128>}, {pipeline_mode = #tpu.pipeline_mode<synchronous>, transform_indices = @transform_6, window_bounds = array<i64: 1, 128>}, {transform_indices = @transform_7, window_bounds = array<i64: 16, 128>}]} {
    %c0 = arith.constant 0 : index
    %c0_0 = arith.constant 0 : index
    %0 = vector.load %arg1[%c0, %c0_0] : memref<16x85xf32, #tpu.memory_space<vmem>>, vector<16x85xf32>
    %1 = arith.truncf %0 : vector<16x85xf32> to vector<16x85xbf16>
    %c0_1 = arith.constant 0 : index
    %c0_2 = arith.constant 0 : index
    %2 = vector.load %arg2[%c0_1, %c0_2] : memref<85x512xbf16, #tpu.memory_space<vmem>>, vector<85x512xbf16>
    %cst = arith.constant dense<0.000000e+00> : vector<16x512xf32>
    %3 = tpu.matmul %1, %2, %cst {dimension_numbers = #tpu.dot_dimension_numbers<[1], [0], [0], [1], [0, 0, 1, 1], [], []>} : vector<16x85xbf16>, vector<85x512xbf16>, vector<16x512xf32> -> vector<16x512xf32>
    %c0_3 = arith.constant 0 : index
    %c0_4 = arith.constant 0 : index
    %4 = vector.load %arg3[%c0_3, %c0_4] : memref<1x512xf32, #tpu.memory_space<vmem>>, vector<1x512xf32>
    %5 = vector.broadcast %4 : vector<1x512xf32> to vector<16x512xf32>
    %6 = arith.addf %3, %5 : vector<16x512xf32>
    %cst_5 = arith.constant 0.000000e+00 : f32
    %7 = vector.broadcast %cst_5 : f32 to vector<16x512xf32>
    %8 = arith.maximumf %6, %7 : vector<16x512xf32>
    %9 = arith.truncf %8 : vector<16x512xf32> to vector<16x512xbf16>
    %c0_6 = arith.constant 0 : index
    %c0_7 = arith.constant 0 : index
    %10 = vector.load %arg4[%c0_6, %c0_7] : memref<512x512xbf16, #tpu.memory_space<vmem>>, vector<512x512xbf16>
    %cst_8 = arith.constant dense<0.000000e+00> : vector<16x512xf32>
    %11 = tpu.matmul %9, %10, %cst_8 {dimension_numbers = #tpu.dot_dimension_numbers<[1], [0], [0], [1], [0, 0, 1, 1], [], []>} : vector<16x512xbf16>, vector<512x512xbf16>, vector<16x512xf32> -> vector<16x512xf32>
    %c0_9 = arith.constant 0 : index
    %c0_10 = arith.constant 0 : index
    %12 = vector.load %arg5[%c0_9, %c0_10] : memref<1x512xf32, #tpu.memory_space<vmem>>, vector<1x512xf32>
    %13 = vector.broadcast %12 : vector<1x512xf32> to vector<16x512xf32>
    %14 = arith.addf %11, %13 : vector<16x512xf32>
    %cst_11 = arith.constant 0.000000e+00 : f32
    %15 = vector.broadcast %cst_11 : f32 to vector<16x512xf32>
    %16 = arith.maximumf %14, %15 : vector<16x512xf32>
    %17 = arith.truncf %16 : vector<16x512xf32> to vector<16x512xbf16>
    %c0_12 = arith.constant 0 : index
    %c0_13 = arith.constant 0 : index
    %18 = vector.load %arg6[%c0_12, %c0_13] : memref<512x128xbf16, #tpu.memory_space<vmem>>, vector<512x128xbf16>
    %cst_14 = arith.constant dense<0.000000e+00> : vector<16x128xf32>
    %19 = tpu.matmul %17, %18, %cst_14 {dimension_numbers = #tpu.dot_dimension_numbers<[1], [0], [0], [1], [0, 0, 1, 1], [], []>} : vector<16x512xbf16>, vector<512x128xbf16>, vector<16x128xf32> -> vector<16x128xf32>
    %c0_15 = arith.constant 0 : index
    %c0_16 = arith.constant 0 : index
    %20 = vector.load %arg7[%c0_15, %c0_16] : memref<1x128xf32, #tpu.memory_space<vmem>>, vector<1x128xf32>
    %21 = vector.broadcast %20 : vector<1x128xf32> to vector<16x128xf32>
    %22 = arith.addf %19, %21 : vector<16x128xf32>
    %23 = arith.truncf %22 : vector<16x128xf32> to vector<16x128xbf16>
    %c0_17 = arith.constant 0 : index
    %c0_18 = arith.constant 0 : index
    %24 = vector.load %arg8[%c0_17, %c0_18] : memref<16x128xbf16, #tpu.memory_space<vmem>>, vector<16x128xbf16>
    tpu.vector_store %arg8[%c0_17, %c0_18], %23 {strides = array<i32>} : memref<16x128xbf16, #tpu.memory_space<vmem>>, vector<16x128xbf16>,
    return
  }
  func.func @transform_0(%arg0: i32) -> (i32, i32) {
    %c0_i32 = arith.constant 0 : i32
    %c0_i32_0 = arith.constant 0 : i32
    return %arg0, %c0_i32 : i32, i32
  }
  func.func @transform_1(%arg0: i32) -> (i32, i32) {
    %c0_i32 = arith.constant 0 : i32
    %c0_i32_0 = arith.constant 0 : i32
    %c0_i32_1 = arith.constant 0 : i32
    return %c0_i32, %c0_i32_0 : i32, i32
  }
  func.func @transform_2(%arg0: i32) -> (i32, i32) {
    %c0_i32 = arith.constant 0 : i32
    %c0_i32_0 = arith.constant 0 : i32
    %c0_i32_1 = arith.constant 0 : i32
    return %c0_i32, %c0_i32_0 : i32, i32
  }
  func.func @transform_3(%arg0: i32) -> (i32, i32) {
    %c0_i32 = arith.constant 0 : i32
    %c0_i32_0 = arith.constant 0 : i32
    %c0_i32_1 = arith.constant 0 : i32
    return %c0_i32, %c0_i32_0 : i32, i32
  }
  func.func @transform_4(%arg0: i32) -> (i32, i32) {
    %c0_i32 = arith.constant 0 : i32
    %c0_i32_0 = arith.constant 0 : i32
    %c0_i32_1 = arith.constant 0 : i32
    return %c0_i32, %c0_i32_0 : i32, i32
  }
  func.func @transform_5(%arg0: i32) -> (i32, i32) {
    %c0_i32 = arith.constant 0 : i32
    %c0_i32_0 = arith.constant 0 : i32
    %c0_i32_1 = arith.constant 0 : i32
    return %c0_i32, %c0_i32_0 : i32, i32
  }
  func.func @transform_6(%arg0: i32) -> (i32, i32) {
    %c0_i32 = arith.constant 0 : i32
    %c0_i32_0 = arith.constant 0 : i32
    %c0_i32_1 = arith.constant 0 : i32
    return %c0_i32, %c0_i32_0 : i32, i32
  }
  func.func @transform_7(%arg0: i32) -> (i32, i32) {
    %c0_i32 = arith.constant 0 : i32
    %c0_i32_0 = arith.constant 0 : i32
    return %arg0, %c0_i32 : i32, i32
  }
}

</mosaic_0001>

<llo_original>
// kernel: tpu_custom_call.1
$region0: #{tpu_custom_call.1}
  #allocation0 [shape = 'u32[]', space=smem, size = 0x4, offset = 0x4, fixed_abs, tag = 'smem constant byte address 0x4 - core index']
  #allocation1 [shape = 'u32[72,128]{1,0:T(1,128)}', space=vmem, size = 0x9000, scoped, tag = 'internal scratch']
  %s0 = inlined_call_operand.hbm [shape: f32[8,85], index: 0, kind: input, shape index: {}]
  %s1 = inlined_call_operand.hbm [shape: bf16[85,512], index: 1, kind: input, shape index: {}]
  %s2 = inlined_call_operand.hbm [shape: f32[1,512], index: 2, kind: input, shape index: {}]
  %s3 = inlined_call_operand.hbm [shape: bf16[512,512], index: 3, kind: input, shape index: {}]
  %s4 = inlined_call_operand.hbm [shape: f32[1,512], index: 4, kind: input, shape index: {}]
  %s5 = inlined_call_operand.hbm [shape: bf16[512,128], index: 5, kind: input, shape index: {}]
  %s6 = inlined_call_operand.vmem [shape: f32[1,128], index: 6, kind: input, shape index: {}]
  %s7 = inlined_call_operand.hbm [shape: bf16[16,128], index: 7, kind: output, shape index: {}]
  %s8 = sld [smem:[#allocation0]]
  $region62: #{tpu_custom_call.1} parent=0
    _
  %s10 = ssub.s32 1, %s8
  %s11 = scalar_select 0, %s10, %s8
  $region1: #{tpu_custom_call.1} parent=0
    #allocation2 [shape = 'u8[8192]{0}', space=vmem, size = 0x2000, scoped, tag = 'input window, operand 0, single buffered']
    #allocation3 [shape = 's32[1]{0}', space=sflag, size = 0x4, scoped, tag = 'scoped memory for tpu_custom_call.1']
    #allocation4 [shape = 's32[1]{0}', space=sflag, size = 0x4, scoped, tag = 'scoped memory for tpu_custom_call.1']
    #allocation5 [shape = 'u8[90112]{0}', space=vmem, size = 0x16000, scoped, tag = 'input window, operand 1, single buffered']
    #allocation6 [shape = 's32[1]{0}', space=sflag, size = 0x4, scoped, tag = 'scoped memory for tpu_custom_call.1']
    #allocation7 [shape = 'u8[2048]{0}', space=vmem, size = 0x800, scoped, tag = 'input window, operand 2, single buffered']
    #allocation8 [shape = 'u8[524288]{0}', space=vmem, size = 0x80000, scoped, tag = 'input window, operand 3, single buffered']
    #allocation9 [shape = 's32[1]{0}', space=sflag, size = 0x4, scoped, tag = 'scoped memory for tpu_custom_call.1']
    #allocation10 [shape = 'u8[2048]{0}', space=vmem, size = 0x800, scoped, tag = 'input window, operand 4, single buffered']
    #allocation11 [shape = 'u8[131072]{0}', space=vmem, size = 0x20000, scoped, tag = 'input window, operand 5, single buffered']
    #allocation12 [shape = 's32[1]{0}', space=sflag, size = 0x4, scoped, tag = 'scoped memory for tpu_custom_call.1']
    #allocation13 [shape = 'u8[4096]{0}', space=vmem, size = 0x1000, scoped, tag = 'output window, operand 0, single buffered']
    %12 = vsyncpa [#allocation3], 0
    %13 = vsyncpa [#allocation6], 0
    %14 = vsyncpa [#allocation9], 0
    %15 = vsyncpa [#allocation12], 0
    %16 = vsyncpa [#allocation4], 0
    // Predicated region
    $region2: #{tpu_custom_call.1} parent=1 // pred_check
      _
    $region3: #{tpu_custom_call.1} parent=1 // pred_check_branch
      %18 = sbr.rel (0) target = $region5
    $region4: #{tpu_custom_call.1} parent=1 // pred_region
      %20 = vsyncadd [#allocation3], 128
      %s21 = sshll.u32 %s0, 4
      %s22 = int_to_ptr.hbm [resolvable:$true] %s21
      %s23 = sshll.u32 [#allocation2], 4
      %s24 = int_to_ptr.vmem [resolvable:$true] %s23
      %29 = dma.hbm_to_vmem [thread:$0]  %s22, 128, %s24, [#allocation3], 128, 128, 8
    $region5: #{tpu_custom_call.1} parent=1 // pred_fallthru
      _
    // Predicated region
    $region6: #{tpu_custom_call.1} parent=1 // pred_check
      _
    $region7: #{tpu_custom_call.1} parent=1 // pred_check_branch
      %31 = sbr.rel (0) target = $region9
    $region8: #{tpu_custom_call.1} parent=1 // pred_region
      %33 = vsyncadd [#allocation6], 0
      %s34 = sshll.u32 %s1, 4
      %s35 = int_to_ptr.hbm [resolvable:$true] %s34
      %s36 = sshll.u32 [#allocation5], 4
      %s37 = int_to_ptr.vmem [resolvable:$true] %s36
      %42 = dma.hbm_to_vmem [thread:$0]  %s35, 2816, %s37, [#allocation6], 256, 256, 16
    $region9: #{tpu_custom_call.1} parent=1 // pred_fallthru
      _
    // Predicated region
    $region10: #{tpu_custom_call.1} parent=1 // pred_check
      _
    $region11: #{tpu_custom_call.1} parent=1 // pred_check_branch
      %44 = sbr.rel (0) target = $region13
    $region12: #{tpu_custom_call.1} parent=1 // pred_region
      %46 = vsyncadd [#allocation6], 0
      %s48 = sshll.u32 %s2, 4
      %s49 = int_to_ptr.hbm [resolvable:$true] %s48
      %s50 = sshll.u32 [#allocation7], 4
      %s51 = int_to_ptr.vmem [resolvable:$true] %s50
      %53 = dma.hbm_to_vmem [thread:$0]  %s49, 64, %s51, [#allocation6]
    $region13: #{tpu_custom_call.1} parent=1 // pred_fallthru
      _
    // Predicated region
    $region14: #{tpu_custom_call.1} parent=1 // pred_check
      _
    $region15: #{tpu_custom_call.1} parent=1 // pred_check_branch
      %55 = sbr.rel (0) target = $region17
    $region16: #{tpu_custom_call.1} parent=1 // pred_region
      %57 = vsyncadd [#allocation9], 0
      %s58 = sshll.u32 %s3, 4
      %s59 = int_to_ptr.hbm [resolvable:$true] %s58
      %s60 = sshll.u32 [#allocation8], 4
      %s61 = int_to_ptr.vmem [resolvable:$true] %s60
      %66 = dma.hbm_to_vmem [thread:$0]  %s59, 16384, %s61, [#allocation9], 256, 256, 16
    $region17: #{tpu_custom_call.1} parent=1 // pred_fallthru
      _
    // Predicated region
    $region18: #{tpu_custom_call.1} parent=1 // pred_check
      _
    $region19: #{tpu_custom_call.1} parent=1 // pred_check_branch
      %68 = sbr.rel (0) target = $region21
    $region20: #{tpu_custom_call.1} parent=1 // pred_region
      %70 = vsyncadd [#allocation9], 0
      %s72 = sshll.u32 %s4, 4
      %s73 = int_to_ptr.hbm [resolvable:$true] %s72
      %s74 = sshll.u32 [#allocation10], 4
      %s75 = int_to_ptr.vmem [resolvable:$true] %s74
      %77 = dma.hbm_to_vmem [thread:$0]  %s73, 64, %s75, [#allocation9]
    $region21: #{tpu_custom_call.1} parent=1 // pred_fallthru
      _
    // Predicated region
    $region22: #{tpu_custom_call.1} parent=1 // pred_check
      _
    $region23: #{tpu_custom_call.1} parent=1 // pred_check_branch
      %79 = sbr.rel (0) target = $region25
    $region24: #{tpu_custom_call.1} parent=1 // pred_region
      %81 = vsyncadd [#allocation12], 0
      %s82 = sshll.u32 %s5, 4
      %s83 = int_to_ptr.hbm [resolvable:$true] %s82
      %s84 = sshll.u32 [#allocation11], 4
      %s85 = int_to_ptr.vmem [resolvable:$true] %s84
      %90 = dma.hbm_to_vmem [thread:$0]  %s83, 4096, %s85, [#allocation12], 64, 64, 4
    $region25: #{tpu_custom_call.1} parent=1 // pred_fallthru
      _
    // Predicated region
    $region26: #{tpu_custom_call.1} parent=1 // pred_check
      _
    $region27: #{tpu_custom_call.1} parent=1 // pred_check_branch
      %92 = sbr.rel (0) target = $region29
    $region28: #{tpu_custom_call.1} parent=1 // pred_region
      _
    $region29: #{tpu_custom_call.1} parent=1 // pred_fallthru
      _
    // Predicated region
    $region30: #{tpu_custom_call.1} parent=1 // pred_check
      _
    $region31: #{tpu_custom_call.1} parent=1 // pred_check_branch
      %94 = sbr.rel (0) target = $region33
    $region32: #{tpu_custom_call.1} parent=1 // pred_region
      %96 = dma.done [#allocation3], 256
    $region33: #{tpu_custom_call.1} parent=1 // pred_fallthru
      _
    // Predicated region
    $region34: #{tpu_custom_call.1} parent=1 // pred_check
      _
    $region35: #{tpu_custom_call.1} parent=1 // pred_check_branch
      %98 = sbr.rel (0) target = $region37
    $region36: #{tpu_custom_call.1} parent=1 // pred_region
      %100 = dma.done [#allocation6], 2816
    $region37: #{tpu_custom_call.1} parent=1 // pred_fallthru
      _
    // Predicated region
    $region38: #{tpu_custom_call.1} parent=1 // pred_check
      _
    $region39: #{tpu_custom_call.1} parent=1 // pred_check_branch
      %102 = sbr.rel (0) target = $region41
    $region40: #{tpu_custom_call.1} parent=1 // pred_region
      %104 = dma.done [#allocation6], 64
    $region41: #{tpu_custom_call.1} parent=1 // pred_fallthru
      _
    // Predicated region
    $region42: #{tpu_custom_call.1} parent=1 // pred_check
      _
    $region43: #{tpu_custom_call.1} parent=1 // pred_check_branch
      %106 = sbr.rel (0) target = $region45
    $region44: #{tpu_custom_call.1} parent=1 // pred_region
      %108 = dma.done [#allocation9], 16384
    $region45: #{tpu_custom_call.1} parent=1 // pred_fallthru
      _
    // Predicated region
    $region46: #{tpu_custom_call.1} parent=1 // pred_check
      _
    $region47: #{tpu_custom_call.1} parent=1 // pred_check_branch
      %110 = sbr.rel (0) target = $region49
    $region48: #{tpu_custom_call.1} parent=1 // pred_region
      %112 = dma.done [#allocation9], 64
    $region49: #{tpu_custom_call.1} parent=1 // pred_fallthru
      _
    // Predicated region
    $region50: #{tpu_custom_call.1} parent=1 // pred_check
      _
    $region51: #{tpu_custom_call.1} parent=1 // pred_check_branch
      %114 = sbr.rel (0) target = $region53
    $region52: #{tpu_custom_call.1} parent=1 // pred_region
      %116 = dma.done [#allocation12], 4096
    $region53: #{tpu_custom_call.1} parent=1 // pred_fallthru
      _
    %v118 = vld [vmem:[#allocation2] sm:$0xff]
    %v119 = vld [vmem:[#allocation2 + $0x8] sm:$0xff]
    %v120 = vpack.c.bf16 %v119, %v118
    %v121 = vld [vmem:[#allocation5] sm:$0xff]
    %v122 = vld [vmem:[#allocation5 + $0x8] sm:$0xff]
    %v123 = vld [vmem:[#allocation5 + $0x10] sm:$0xff]
    %v124 = vld [vmem:[#allocation5 + $0x18] sm:$0xff]
    %v125 = vld [vmem:[#allocation5 + $0x20] sm:$0xff]
    %v126 = vld [vmem:[#allocation5 + $0x28] sm:$0xff]
    %v127 = vld [vmem:[#allocation5 + $0x30] sm:$0xff]
    %v128 = vld [vmem:[#allocation5 + $0x38] sm:$0xff]
    %v129 = vld [vmem:[#allocation5 + $0x40] sm:$0xff]
    %v130 = vld [vmem:[#allocation5 + $0x48] sm:$0xff]
    %v131 = vld [vmem:[#allocation5 + $0x50] sm:$0xff]
    %v132 = vld [vmem:[#allocation5 + $0x58] sm:$0xff]
    %v133 = vld [vmem:[#allocation5 + $0x60] sm:$0xff]
    %v134 = vld [vmem:[#allocation5 + $0x68] sm:$0xff]
    %v135 = vld [vmem:[#allocation5 + $0x70] sm:$0xff]
    %v136 = vld [vmem:[#allocation5 + $0x78] sm:$0xff]
    %v137 = vld [vmem:[#allocation5 + $0x80] sm:$0xff]
    %v138 = vld [vmem:[#allocation5 + $0x88] sm:$0xff]
    %v139 = vld [vmem:[#allocation5 + $0x90] sm:$0xff]
    %v140 = vld [vmem:[#allocation5 + $0x98] sm:$0xff]
    %v141 = vld [vmem:[#allocation5 + $0xa0] sm:$0x77]
    %v142 = vld [vmem:[#allocation5 + $0xa8] sm:$0x77]
    %v143 = vld [vmem:[#allocation7] sm:$0xf]
    %v145 = vperm.slane %v143, 0
    %v146 = vperm.slane %v143, 1
    %v147 = vperm.slane %v143, 2
    %v148 = vperm.slane %v143, 3
    %v175 = vunpack.c.l.b16 %v121
    %v176 = vunpack.c.h.b16 %v121
    %v177 = vunpack.c.l.b16 %v122
    %v178 = vunpack.c.h.b16 %v122
    %v179 = vunpack.c.l.b16 %v123
    %v180 = vunpack.c.h.b16 %v123
    %v181 = vunpack.c.l.b16 %v124
    %v182 = vunpack.c.h.b16 %v124
    %v183 = vunpack.c.l.b16 %v125
    %v184 = vunpack.c.h.b16 %v125
    %v185 = vunpack.c.l.b16 %v126
    %v186 = vunpack.c.h.b16 %v126
    %v187 = vunpack.c.l.b16 %v127
    %v188 = vunpack.c.h.b16 %v127
    %v189 = vunpack.c.l.b16 %v128
    %v190 = vunpack.c.h.b16 %v128
    %v191 = vunpack.c.l.b16 %v129
    %v192 = vunpack.c.h.b16 %v129
    %v193 = vunpack.c.l.b16 %v130
    %v194 = vunpack.c.h.b16 %v130
    %v195 = vunpack.c.l.b16 %v131
    %v196 = vunpack.c.h.b16 %v131
    %v197 = vunpack.c.l.b16 %v132
    %v198 = vunpack.c.h.b16 %v132
    %v199 = vunpack.c.l.b16 %v133
    %v200 = vunpack.c.h.b16 %v133
    %v201 = vunpack.c.l.b16 %v134
    %v202 = vunpack.c.h.b16 %v134
    %v203 = vunpack.c.l.b16 %v135
    %v204 = vunpack.c.h.b16 %v135
    %v205 = vunpack.c.l.b16 %v136
    %v206 = vunpack.c.h.b16 %v136
    %v207 = vunpack.c.l.b16 %v137
    %v208 = vunpack.c.h.b16 %v137
    %v209 = vunpack.c.l.b16 %v138
    %v210 = vunpack.c.h.b16 %v138
    %v211 = vunpack.c.l.b16 %v139
    %v212 = vunpack.c.h.b16 %v139
    %v213 = vunpack.c.l.b16 %v140
    %v214 = vunpack.c.h.b16 %v140
    %v215 = vunpack.c.l.b16 %v141
    %v216 = vunpack.c.h.b16 %v141
    %v217 = vunpack.c.l.b16 %v142
    %v218 = vunpack.c.h.b16 %v142
    %v219 = vpack.c.b16 %v179, %v175
    %v220 = vpack.c.b16 %v180, %v176
    %v221 = vpack.c.b16 %v181, %v177
    %v222 = vpack.c.b16 %v182, %v178
    %v223 = vpack.c.b16 %v187, %v183
    %v224 = vpack.c.b16 %v188, %v184
    %v225 = vpack.c.b16 %v189, %v185
    %v226 = vpack.c.b16 %v190, %v186
    %v227 = vpack.c.b16 %v195, %v191
    %v228 = vpack.c.b16 %v196, %v192
    %v229 = vpack.c.b16 %v197, %v193
    %v230 = vpack.c.b16 %v198, %v194
    %v231 = vpack.c.b16 %v203, %v199
    %v232 = vpack.c.b16 %v204, %v200
    %v233 = vpack.c.b16 %v205, %v201
    %v234 = vpack.c.b16 %v206, %v202
    %v235 = vpack.c.b16 %v211, %v207
    %v236 = vpack.c.b16 %v212, %v208
    %v237 = vpack.c.b16 %v213, %v209
    %v238 = vpack.c.b16 %v214, %v210
    %v239 = vpack.c.b16 %v215, %v215
    %v240 = vpack.c.b16 %v216, %v216
    %v241 = vpack.c.b16 %v217, %v217
    %v242 = vpack.c.b16 %v218, %v218
    %vm263 = vcmask 695296
    %v265 = vsel %vm263, %v120, 0
    %vm267 = vcmask 1041408
    %vm268 = vcmask 1042432
    %v269 = vsel %vm267, 4294967295, 65535
    %v270 = vsel %vm268, %v269, 0
    %v272 = vand.u32 %v239, %v270
    %v275 = vand.u32 %v240, %v270
    %v278 = vand.u32 %v241, %v270
    %v281 = vand.u32 %v242, %v270
    %283 = vmatpush.bf16.msra.mxu0 0
    %284 = vmatpush.bf16.msra.mxu0 0
    %285 = vmatpush.bf16.msra.mxu0 %v272
    %286 = vmatpush.bf16.msra.mxu0 %v235
    %287 = vmatpush.bf16.msra.mxu0 %v231
    %288 = vmatpush.bf16.msra.mxu0 %v227
    %289 = vmatpush.bf16.msra.mxu0 %v223
    %290 = vmatpush.bf16.msra.mxu0 %v219
    %291 = vmatmul.bf16.gmra.mxu0 %v265
    %v292 = vpop.f32.mrf.mxu0
    %v293 = vadd.f32 %v145, %v292
    %v294 = vpop.f32.mrf.mxu0
    %v295 = vadd.f32 %v145, %v294
    %296 = vdwg.mxu0
    %297 = vmatpush.bf16.msra.mxu0 0
    %298 = vmatpush.bf16.msra.mxu0 0
    %299 = vmatpush.bf16.msra.mxu0 %v275
    %300 = vmatpush.bf16.msra.mxu0 %v236
    %301 = vmatpush.bf16.msra.mxu0 %v232
    %302 = vmatpush.bf16.msra.mxu0 %v228
    %303 = vmatpush.bf16.msra.mxu0 %v224
    %304 = vmatpush.bf16.msra.mxu0 %v220
    %305 = vmatmul.bf16.gmra.mxu0 %v265
    %v306 = vpop.f32.mrf.mxu0
    %v307 = vadd.f32 %v146, %v306
    %v308 = vpop.f32.mrf.mxu0
    %v309 = vadd.f32 %v146, %v308
    %310 = vdwg.mxu0
    %311 = vmatpush.bf16.msra.mxu0 0
    %312 = vmatpush.bf16.msra.mxu0 0
    %313 = vmatpush.bf16.msra.mxu0 %v278
    %314 = vmatpush.bf16.msra.mxu0 %v237
    %315 = vmatpush.bf16.msra.mxu0 %v233
    %316 = vmatpush.bf16.msra.mxu0 %v229
    %317 = vmatpush.bf16.msra.mxu0 %v225
    %318 = vmatpush.bf16.msra.mxu0 %v221
    %319 = vmatmul.bf16.gmra.mxu0 %v265
    %v320 = vpop.f32.mrf.mxu0
    %v321 = vadd.f32 %v147, %v320
    %v322 = vpop.f32.mrf.mxu0
    %v323 = vadd.f32 %v147, %v322
    %324 = vdwg.mxu0
    %325 = vmatpush.bf16.msra.mxu0 0
    %326 = vmatpush.bf16.msra.mxu0 0
    %327 = vmatpush.bf16.msra.mxu0 %v281
    %328 = vmatpush.bf16.msra.mxu0 %v238
    %329 = vmatpush.bf16.msra.mxu0 %v234
    %330 = vmatpush.bf16.msra.mxu0 %v230
    %331 = vmatpush.bf16.msra.mxu0 %v226
    %332 = vmatpush.bf16.msra.mxu0 %v222
    %333 = vmatmul.bf16.gmra.mxu0 %v265
    %v334 = vpop.f32.mrf.mxu0
    %v335 = vadd.f32 %v148, %v334
    %v336 = vpop.f32.mrf.mxu0
    %v337 = vadd.f32 %v148, %v336
    %338 = vdwg.mxu0
    %v339 = vmax.f32 %v293, 0.0
    %v340 = vmax.f32 %v307, 0.0
    %v341 = vmax.f32 %v321, 0.0
    %v342 = vmax.f32 %v335, 0.0
    %v343 = vmax.f32 %v295, 0.0
    %v344 = vmax.f32 %v309, 0.0
    %v345 = vmax.f32 %v323, 0.0
    %v346 = vmax.f32 %v337, 0.0
    %v347 = vpack.c.bf16 %v343, %v339
    %v348 = vpack.c.bf16 %v344, %v340
    %v349 = vpack.c.bf16 %v345, %v341
    %v350 = vpack.c.bf16 %v346, %v342
    %v351 = vld [vmem:[#allocation8] sm:$0xff]
    %v352 = vld [vmem:[#allocation8 + $0x8] sm:$0xff]
    %v353 = vld [vmem:[#allocation8 + $0x10] sm:$0xff]
    %v354 = vld [vmem:[#allocation8 + $0x18] sm:$0xff]
    %v355 = vld [vmem:[#allocation8 + $0x20] sm:$0xff]
    %v356 = vld [vmem:[#allocation8 + $0x28] sm:$0xff]
    %v357 = vld [vmem:[#allocation8 + $0x30] sm:$0xff]
    %v358 = vld [vmem:[#allocation8 + $0x38] sm:$0xff]
    %v359 = vld [vmem:[#allocation8 + $0x40] sm:$0xff]
    %v360 = vld [vmem:[#allocation8 + $0x48] sm:$0xff]
    %v361 = vld [vmem:[#allocation8 + $0x50] sm:$0xff]
    %v362 = vld [vmem:[#allocation8 + $0x58] sm:$0xff]
    %v363 = vld [vmem:[#allocation8 + $0x60] sm:$0xff]
    %v364 = vld [vmem:[#allocation8 + $0x68] sm:$0xff]
    %v365 = vld [vmem:[#allocation8 + $0x70] sm:$0xff]
    %v366 = vld [vmem:[#allocation8 + $0x78] sm:$0xff]
    %v367 = vld [vmem:[#allocation8 + $0x80] sm:$0xff]
    %v368 = vld [vmem:[#allocation8 + $0x88] sm:$0xff]
    %v369 = vld [vmem:[#allocation8 + $0x90] sm:$0xff]
    %v370 = vld [vmem:[#allocation8 + $0x98] sm:$0xff]
    %v371 = vld [vmem:[#allocation8 + $0xa0] sm:$0xff]
    %v372 = vld [vmem:[#allocation8 + $0xa8] sm:$0xff]
    %v373 = vld [vmem:[#allocation8 + $0xb0] sm:$0xff]
    %v374 = vld [vmem:[#allocation8 + $0xb8] sm:$0xff]
    %v375 = vld [vmem:[#allocation8 + $0xc0] sm:$0xff]
    %v376 = vld [vmem:[#allocation8 + $0xc8] sm:$0xff]
    %v377 = vld [vmem:[#allocation8 + $0xd0] sm:$0xff]
    %v378 = vld [vmem:[#allocation8 + $0xd8] sm:$0xff]
    %v379 = vld [vmem:[#allocation8 + $0xe0] sm:$0xff]
    %v380 = vld [vmem:[#allocation8 + $0xe8] sm:$0xff]
    %v381 = vld [vmem:[#allocation8 + $0xf0] sm:$0xff]
    %v382 = vld [vmem:[#allocation8 + $0xf8] sm:$0xff]
    %v383 = vld [vmem:[#allocation8 + $0x100] sm:$0xff]
    %v384 = vld [vmem:[#allocation8 + $0x108] sm:$0xff]
    %v385 = vld [vmem:[#allocation8 + $0x110] sm:$0xff]
    %v386 = vld [vmem:[#allocation8 + $0x118] sm:$0xff]
    %v387 = vld [vmem:[#allocation8 + $0x120] sm:$0xff]
    %v388 = vld [vmem:[#allocation8 + $0x128] sm:$0xff]
    %v389 = vld [vmem:[#allocation8 + $0x130] sm:$0xff]
    %v390 = vld [vmem:[#allocation8 + $0x138] sm:$0xff]
    %v391 = vld [vmem:[#allocation8 + $0x140] sm:$0xff]
    %v392 = vld [vmem:[#allocation8 + $0x148] sm:$0xff]
    %v393 = vld [vmem:[#allocation8 + $0x150] sm:$0xff]
    %v394 = vld [vmem:[#allocation8 + $0x158] sm:$0xff]
    %v395 = vld [vmem:[#allocation8 + $0x160] sm:$0xff]
    %v396 = vld [vmem:[#allocation8 + $0x168] sm:$0xff]
    %v397 = vld [vmem:[#allocation8 + $0x170] sm:$0xff]
    %v398 = vld [vmem:[#allocation8 + $0x178] sm:$0xff]
    %v399 = vld [vmem:[#allocation8 + $0x180] sm:$0xff]
    %v400 = vld [vmem:[#allocation8 + $0x188] sm:$0xff]
    %v401 = vld [vmem:[#allocation8 + $0x190] sm:$0xff]
    %v402 = vld [vmem:[#allocation8 + $0x198] sm:$0xff]
    %v403 = vld [vmem:[#allocation8 + $0x1a0] sm:$0xff]
    %v404 = vld [vmem:[#allocation8 + $0x1a8] sm:$0xff]
    %v405 = vld [vmem:[#allocation8 + $0x1b0] sm:$0xff]
    %v406 = vld [vmem:[#allocation8 + $0x1b8] sm:$0xff]
    %v407 = vld [vmem:[#allocation8 + $0x1c0] sm:$0xff]
    %v408 = vld [vmem:[#allocation8 + $0x1c8] sm:$0xff]
    %v409 = vld [vmem:[#allocation8 + $0x1d0] sm:$0xff]
    %v410 = vld [vmem:[#allocation8 + $0x1d8] sm:$0xff]
    %v411 = vld [vmem:[#allocation8 + $0x1e0] sm:$0xff]
    %v412 = vld [vmem:[#allocation8 + $0x1e8] sm:$0xff]
    %v413 = vld [vmem:[#allocation8 + $0x1f0] sm:$0xff]
    %v414 = vld [vmem:[#allocation8 + $0x1f8] sm:$0xff]
    %v415 = vld [vmem:[#allocation8 + $0x200] sm:$0xff]
    %v416 = vld [vmem:[#allocation8 + $0x208] sm:$0xff]
    %v417 = vld [vmem:[#allocation8 + $0x210] sm:$0xff]
    %v418 = vld [vmem:[#allocation8 + $0x218] sm:$0xff]
    %v419 = vld [vmem:[#allocation8 + $0x220] sm:$0xff]
    %v420 = vld [vmem:[#allocation8 + $0x228] sm:$0xff]
    %v421 = vld [vmem:[#allocation8 + $0x230] sm:$0xff]
    %v422 = vld [vmem:[#allocation8 + $0x238] sm:$0xff]
    %v423 = vld [vmem:[#allocation8 + $0x240] sm:$0xff]
    %v424 = vld [vmem:[#allocation8 + $0x248] sm:$0xff]
    %v425 = vld [vmem:[#allocation8 + $0x250] sm:$0xff]
    %v426 = vld [vmem:[#allocation8 + $0x258] sm:$0xff]
    %v427 = vld [vmem:[#allocation8 + $0x260] sm:$0xff]
    %v428 = vld [vmem:[#allocation8 + $0x268] sm:$0xff]
    %v429 = vld [vmem:[#allocation8 + $0x270] sm:$0xff]
    %v430 = vld [vmem:[#allocation8 + $0x278] sm:$0xff]
    %v431 = vld [vmem:[#allocation8 + $0x280] sm:$0xff]
    %v432 = vld [vmem:[#allocation8 + $0x288] sm:$0xff]
    %v433 = vld [vmem:[#allocation8 + $0x290] sm:$0xff]
    %v434 = vld [vmem:[#allocation8 + $0x298] sm:$0xff]
    %v435 = vld [vmem:[#allocation8 + $0x2a0] sm:$0xff]
    %v436 = vld [vmem:[#allocation8 + $0x2a8] sm:$0xff]
    %v437 = vld [vmem:[#allocation8 + $0x2b0] sm:$0xff]
    %v438 = vld [vmem:[#allocation8 + $0x2b8] sm:$0xff]
    %v439 = vld [vmem:[#allocation8 + $0x2c0] sm:$0xff]
    %v440 = vld [vmem:[#allocation8 + $0x2c8] sm:$0xff]
    %v441 = vld [vmem:[#allocation8 + $0x2d0] sm:$0xff]
    %v442 = vld [vmem:[#allocation8 + $0x2d8] sm:$0xff]
    %v443 = vld [vmem:[#allocation8 + $0x2e0] sm:$0xff]
    %v444 = vld [vmem:[#allocation8 + $0x2e8] sm:$0xff]
    %v445 = vld [vmem:[#allocation8 + $0x2f0] sm:$0xff]
    %v446 = vld [vmem:[#allocation8 + $0x2f8] sm:$0xff]
    %v447 = vld [vmem:[#allocation8 + $0x300] sm:$0xff]
    %v448 = vld [vmem:[#allocation8 + $0x308] sm:$0xff]
    %v449 = vld [vmem:[#allocation8 + $0x310] sm:$0xff]
    %v450 = vld [vmem:[#allocation8 + $0x318] sm:$0xff]
    %v451 = vld [vmem:[#allocation8 + $0x320] sm:$0xff]
    %v452 = vld [vmem:[#allocation8 + $0x328] sm:$0xff]
    %v453 = vld [vmem:[#allocation8 + $0x330] sm:$0xff]
    %v454 = vld [vmem:[#allocation8 + $0x338] sm:$0xff]
    %v455 = vld [vmem:[#allocation8 + $0x340] sm:$0xff]
    %v456 = vld [vmem:[#allocation8 + $0x348] sm:$0xff]
    %v457 = vld [vmem:[#allocation8 + $0x350] sm:$0xff]
    %v458 = vld [vmem:[#allocation8 + $0x358] sm:$0xff]
    %v459 = vld [vmem:[#allocation8 + $0x360] sm:$0xff]
    %v460 = vld [vmem:[#allocation8 + $0x368] sm:$0xff]
    %v461 = vld [vmem:[#allocation8 + $0x370] sm:$0xff]
    %v462 = vld [vmem:[#allocation8 + $0x378] sm:$0xff]
    %v463 = vld [vmem:[#allocation8 + $0x380] sm:$0xff]
    %v464 = vld [vmem:[#allocation8 + $0x388] sm:$0xff]
    %v465 = vld [vmem:[#allocation8 + $0x390] sm:$0xff]
    %v466 = vld [vmem:[#allocation8 + $0x398] sm:$0xff]
    %v467 = vld [vmem:[#allocation8 + $0x3a0] sm:$0xff]
    %v468 = vld [vmem:[#allocation8 + $0x3a8] sm:$0xff]
    %v469 = vld [vmem:[#allocation8 + $0x3b0] sm:$0xff]
    %v470 = vld [vmem:[#allocation8 + $0x3b8] sm:$0xff]
    %v471 = vld [vmem:[#allocation8 + $0x3c0] sm:$0xff]
    %v472 = vld [vmem:[#allocation8 + $0x3c8] sm:$0xff]
    %v473 = vld [vmem:[#allocation8 + $0x3d0] sm:$0xff]
    %v474 = vld [vmem:[#allocation8 + $0x3d8] sm:$0xff]
    %v475 = vld [vmem:[#allocation8 + $0x3e0] sm:$0xff]
    %v476 = vld [vmem:[#allocation8 + $0x3e8] sm:$0xff]
    %v477 = vld [vmem:[#allocation8 + $0x3f0] sm:$0xff]
    %v478 = vld [vmem:[#allocation8 + $0x3f8] sm:$0xff]
    %v479 = vld [vmem:[#allocation10] sm:$0xf]
    %v481 = vperm.slane %v479, 0
    %v482 = vperm.slane %v479, 1
    %v483 = vperm.slane %v479, 2
    %v484 = vperm.slane %v479, 3
    %v617 = vunpack.c.l.b16 %v351
    %v618 = vunpack.c.h.b16 %v351
    %v619 = vunpack.c.l.b16 %v352
    %v620 = vunpack.c.h.b16 %v352
    %v621 = vunpack.c.l.b16 %v353
    %v622 = vunpack.c.h.b16 %v353
    %v623 = vunpack.c.l.b16 %v354
    %v624 = vunpack.c.h.b16 %v354
    %v625 = vunpack.c.l.b16 %v355
    %v626 = vunpack.c.h.b16 %v355
    %v627 = vunpack.c.l.b16 %v356
    %v628 = vunpack.c.h.b16 %v356
    %v629 = vunpack.c.l.b16 %v357
    %v630 = vunpack.c.h.b16 %v357
    %v631 = vunpack.c.l.b16 %v358
    %v632 = vunpack.c.h.b16 %v358
    %v633 = vunpack.c.l.b16 %v359
    %v634 = vunpack.c.h.b16 %v359
    %v635 = vunpack.c.l.b16 %v360
    %v636 = vunpack.c.h.b16 %v360
    %v637 = vunpack.c.l.b16 %v361
    %v638 = vunpack.c.h.b16 %v361
    %v639 = vunpack.c.l.b16 %v362
    %v640 = vunpack.c.h.b16 %v362
    %v641 = vunpack.c.l.b16 %v363
    %v642 = vunpack.c.h.b16 %v363
    %v643 = vunpack.c.l.b16 %v364
    %v644 = vunpack.c.h.b16 %v364
    %v645 = vunpack.c.l.b16 %v365
    %v646 = vunpack.c.h.b16 %v365
    %v647 = vunpack.c.l.b16 %v366
    %v648 = vunpack.c.h.b16 %v366
    %v649 = vunpack.c.l.b16 %v367
    %v650 = vunpack.c.h.b16 %v367
    %v651 = vunpack.c.l.b16 %v368
    %v652 = vunpack.c.h.b16 %v368
    %v653 = vunpack.c.l.b16 %v369
    %v654 = vunpack.c.h.b16 %v369
    %v655 = vunpack.c.l.b16 %v370
    %v656 = vunpack.c.h.b16 %v370
    %v657 = vunpack.c.l.b16 %v371
    %v658 = vunpack.c.h.b16 %v371
    %v659 = vunpack.c.l.b16 %v372
    %v660 = vunpack.c.h.b16 %v372
    %v661 = vunpack.c.l.b16 %v373
    %v662 = vunpack.c.h.b16 %v373
    %v663 = vunpack.c.l.b16 %v374
    %v664 = vunpack.c.h.b16 %v374
    %v665 = vunpack.c.l.b16 %v375
    %v666 = vunpack.c.h.b16 %v375
    %v667 = vunpack.c.l.b16 %v376
    %v668 = vunpack.c.h.b16 %v376
    %v669 = vunpack.c.l.b16 %v377
    %v670 = vunpack.c.h.b16 %v377
    %v671 = vunpack.c.l.b16 %v378
    %v672 = vunpack.c.h.b16 %v378
    %v673 = vunpack.c.l.b16 %v379
    %v674 = vunpack.c.h.b16 %v379
    %v675 = vunpack.c.l.b16 %v380
    %v676 = vunpack.c.h.b16 %v380
    %v677 = vunpack.c.l.b16 %v381
    %v678 = vunpack.c.h.b16 %v381
    %v679 = vunpack.c.l.b16 %v382
    %v680 = vunpack.c.h.b16 %v382
    %v681 = vunpack.c.l.b16 %v383
    %v682 = vunpack.c.h.b16 %v383
    %v683 = vunpack.c.l.b16 %v384
    %v684 = vunpack.c.h.b16 %v384
    %v685 = vunpack.c.l.b16 %v385
    %v686 = vunpack.c.h.b16 %v385
    %v687 = vunpack.c.l.b16 %v386
    %v688 = vunpack.c.h.b16 %v386
    %v689 = vunpack.c.l.b16 %v387
    %v690 = vunpack.c.h.b16 %v387
    %v691 = vunpack.c.l.b16 %v388
    %v692 = vunpack.c.h.b16 %v388
    %v693 = vunpack.c.l.b16 %v389
    %v694 = vunpack.c.h.b16 %v389
    %v695 = vunpack.c.l.b16 %v390
    %v696 = vunpack.c.h.b16 %v390
    %v697 = vunpack.c.l.b16 %v391
    %v698 = vunpack.c.h.b16 %v391
    %v699 = vunpack.c.l.b16 %v392
    %v700 = vunpack.c.h.b16 %v392
    %v701 = vunpack.c.l.b16 %v393
    %v702 = vunpack.c.h.b16 %v393
    %v703 = vunpack.c.l.b16 %v394
    %v704 = vunpack.c.h.b16 %v394
    %v705 = vunpack.c.l.b16 %v395
    %v706 = vunpack.c.h.b16 %v395
    %v707 = vunpack.c.l.b16 %v396
    %v708 = vunpack.c.h.b16 %v396
    %v709 = vunpack.c.l.b16 %v397
    %v710 = vunpack.c.h.b16 %v397
    %v711 = vunpack.c.l.b16 %v398
    %v712 = vunpack.c.h.b16 %v398
    %v713 = vunpack.c.l.b16 %v399
    %v714 = vunpack.c.h.b16 %v399
    %v715 = vunpack.c.l.b16 %v400
    %v716 = vunpack.c.h.b16 %v400
    %v717 = vunpack.c.l.b16 %v401
    %v718 = vunpack.c.h.b16 %v401
    %v719 = vunpack.c.l.b16 %v402
    %v720 = vunpack.c.h.b16 %v402
    %v721 = vunpack.c.l.b16 %v403
    %v722 = vunpack.c.h.b16 %v403
    %v723 = vunpack.c.l.b16 %v404
    %v724 = vunpack.c.h.b16 %v404
    %v725 = vunpack.c.l.b16 %v405
    %v726 = vunpack.c.h.b16 %v405
    %v727 = vunpack.c.l.b16 %v406
    %v728 = vunpack.c.h.b16 %v406
    %v729 = vunpack.c.l.b16 %v407
    %v730 = vunpack.c.h.b16 %v407
    %v731 = vunpack.c.l.b16 %v408
    %v732 = vunpack.c.h.b16 %v408
    %v733 = vunpack.c.l.b16 %v409
    %v734 = vunpack.c.h.b16 %v409
    %v735 = vunpack.c.l.b16 %v410
    %v736 = vunpack.c.h.b16 %v410
    %v737 = vunpack.c.l.b16 %v411
    %v738 = vunpack.c.h.b16 %v411
    %v739 = vunpack.c.l.b16 %v412
    %v740 = vunpack.c.h.b16 %v412
    %v741 = vunpack.c.l.b16 %v413
    %v742 = vunpack.c.h.b16 %v413
    %v743 = vunpack.c.l.b16 %v414
    %v744 = vunpack.c.h.b16 %v414
    %v745 = vunpack.c.l.b16 %v415
    %v746 = vunpack.c.h.b16 %v415
    %v747 = vunpack.c.l.b16 %v416
    %v748 = vunpack.c.h.b16 %v416
    %v749 = vunpack.c.l.b16 %v417
    %v750 = vunpack.c.h.b16 %v417
    %v751 = vunpack.c.l.b16 %v418
    %v752 = vunpack.c.h.b16 %v418
    %v753 = vunpack.c.l.b16 %v419
    %v754 = vunpack.c.h.b16 %v419
    %v755 = vunpack.c.l.b16 %v420
    %v756 = vunpack.c.h.b16 %v420
    %v757 = vunpack.c.l.b16 %v421
    %v758 = vunpack.c.h.b16 %v421
    %v759 = vunpack.c.l.b16 %v422
    %v760 = vunpack.c.h.b16 %v422
    %v761 = vunpack.c.l.b16 %v423
    %v762 = vunpack.c.h.b16 %v423
    %v763 = vunpack.c.l.b16 %v424
    %v764 = vunpack.c.h.b16 %v424
    %v765 = vunpack.c.l.b16 %v425
    %v766 = vunpack.c.h.b16 %v425
    %v767 = vunpack.c.l.b16 %v426
    %v768 = vunpack.c.h.b16 %v426
    %v769 = vunpack.c.l.b16 %v427
    %v770 = vunpack.c.h.b16 %v427
    %v771 = vunpack.c.l.b16 %v428
    %v772 = vunpack.c.h.b16 %v428
    %v773 = vunpack.c.l.b16 %v429
    %v774 = vunpack.c.h.b16 %v429
    %v775 = vunpack.c.l.b16 %v430
    %v776 = vunpack.c.h.b16 %v430
    %v777 = vunpack.c.l.b16 %v431
    %v778 = vunpack.c.h.b16 %v431
    %v779 = vunpack.c.l.b16 %v432
    %v780 = vunpack.c.h.b16 %v432
    %v781 = vunpack.c.l.b16 %v433
    %v782 = vunpack.c.h.b16 %v433
    %v783 = vunpack.c.l.b16 %v434
    %v784 = vunpack.c.h.b16 %v434
    %v785 = vunpack.c.l.b16 %v435
    %v786 = vunpack.c.h.b16 %v435
    %v787 = vunpack.c.l.b16 %v436
    %v788 = vunpack.c.h.b16 %v436
    %v789 = vunpack.c.l.b16 %v437
    %v790 = vunpack.c.h.b16 %v437
    %v791 = vunpack.c.l.b16 %v438
    %v792 = vunpack.c.h.b16 %v438
    %v793 = vunpack.c.l.b16 %v439
    %v794 = vunpack.c.h.b16 %v439
    %v795 = vunpack.c.l.b16 %v440
    %v796 = vunpack.c.h.b16 %v440
    %v797 = vunpack.c.l.b16 %v441
    %v798 = vunpack.c.h.b16 %v441
    %v799 = vunpack.c.l.b16 %v442
    %v800 = vunpack.c.h.b16 %v442
    %v801 = vunpack.c.l.b16 %v443
    %v802 = vunpack.c.h.b16 %v443
    %v803 = vunpack.c.l.b16 %v444
    %v804 = vunpack.c.h.b16 %v444
    %v805 = vunpack.c.l.b16 %v445
    %v806 = vunpack.c.h.b16 %v445
    %v807 = vunpack.c.l.b16 %v446
    %v808 = vunpack.c.h.b16 %v446
    %v809 = vunpack.c.l.b16 %v447
    %v810 = vunpack.c.h.b16 %v447
    %v811 = vunpack.c.l.b16 %v448
    %v812 = vunpack.c.h.b16 %v448
    %v813 = vunpack.c.l.b16 %v449
    %v814 = vunpack.c.h.b16 %v449
    %v815 = vunpack.c.l.b16 %v450
    %v816 = vunpack.c.h.b16 %v450
    %v817 = vunpack.c.l.b16 %v451
    %v818 = vunpack.c.h.b16 %v451
    %v819 = vunpack.c.l.b16 %v452
    %v820 = vunpack.c.h.b16 %v452
    %v821 = vunpack.c.l.b16 %v453
    %v822 = vunpack.c.h.b16 %v453
    %v823 = vunpack.c.l.b16 %v454
    %v824 = vunpack.c.h.b16 %v454
    %v825 = vunpack.c.l.b16 %v455
    %v826 = vunpack.c.h.b16 %v455
    %v827 = vunpack.c.l.b16 %v456
    %v828 = vunpack.c.h.b16 %v456
    %v829 = vunpack.c.l.b16 %v457
    %v830 = vunpack.c.h.b16 %v457
    %v831 = vunpack.c.l.b16 %v458
    %v832 = vunpack.c.h.b16 %v458
    %v833 = vunpack.c.l.b16 %v459
    %v834 = vunpack.c.h.b16 %v459
    %v835 = vunpack.c.l.b16 %v460
    %v836 = vunpack.c.h.b16 %v460
    %v837 = vunpack.c.l.b16 %v461
    %v838 = vunpack.c.h.b16 %v461
    %v839 = vunpack.c.l.b16 %v462
    %v840 = vunpack.c.h.b16 %v462
    %v841 = vunpack.c.l.b16 %v463
    %v842 = vunpack.c.h.b16 %v463
    %v843 = vunpack.c.l.b16 %v464
    %v844 = vunpack.c.h.b16 %v464
    %v845 = vunpack.c.l.b16 %v465
    %v846 = vunpack.c.h.b16 %v465
    %v847 = vunpack.c.l.b16 %v466
    %v848 = vunpack.c.h.b16 %v466
    %v849 = vunpack.c.l.b16 %v467
    %v850 = vunpack.c.h.b16 %v467
    %v851 = vunpack.c.l.b16 %v468
    %v852 = vunpack.c.h.b16 %v468
    %v853 = vunpack.c.l.b16 %v469
    %v854 = vunpack.c.h.b16 %v469
    %v855 = vunpack.c.l.b16 %v470
    %v856 = vunpack.c.h.b16 %v470
    %v857 = vunpack.c.l.b16 %v471
    %v858 = vunpack.c.h.b16 %v471
    %v859 = vunpack.c.l.b16 %v472
    %v860 = vunpack.c.h.b16 %v472
    %v861 = vunpack.c.l.b16 %v473
    %v862 = vunpack.c.h.b16 %v473
    %v863 = vunpack.c.l.b16 %v474
    %v864 = vunpack.c.h.b16 %v474
    %v865 = vunpack.c.l.b16 %v475
    %v866 = vunpack.c.h.b16 %v475
    %v867 = vunpack.c.l.b16 %v476
    %v868 = vunpack.c.h.b16 %v476
    %v869 = vunpack.c.l.b16 %v477
    %v870 = vunpack.c.h.b16 %v477
    %v871 = vunpack.c.l.b16 %v478
    %v872 = vunpack.c.h.b16 %v478
    %v873 = vpack.c.b16 %v621, %v617
    %v874 = vpack.c.b16 %v622, %v618
    %v875 = vpack.c.b16 %v623, %v619
    %v876 = vpack.c.b16 %v624, %v620
    %v877 = vpack.c.b16 %v629, %v625
    %v878 = vpack.c.b16 %v630, %v626
    %v879 = vpack.c.b16 %v631, %v627
    %v880 = vpack.c.b16 %v632, %v628
    %v881 = vpack.c.b16 %v637, %v633
    %v882 = vpack.c.b16 %v638, %v634
    %v883 = vpack.c.b16 %v639, %v635
    %v884 = vpack.c.b16 %v640, %v636
    %v885 = vpack.c.b16 %v645, %v641
    %v886 = vpack.c.b16 %v646, %v642
    %v887 = vpack.c.b16 %v647, %v643
    %v888 = vpack.c.b16 %v648, %v644
    %v889 = vpack.c.b16 %v653, %v649
    %v890 = vpack.c.b16 %v654, %v650
    %v891 = vpack.c.b16 %v655, %v651
    %v892 = vpack.c.b16 %v656, %v652
    %v893 = vpack.c.b16 %v661, %v657
    %v894 = vpack.c.b16 %v662, %v658
    %v895 = vpack.c.b16 %v663, %v659
    %v896 = vpack.c.b16 %v664, %v660
    %v897 = vpack.c.b16 %v669, %v665
    %v898 = vpack.c.b16 %v670, %v666
    %v899 = vpack.c.b16 %v671, %v667
    %v900 = vpack.c.b16 %v672, %v668
    %v901 = vpack.c.b16 %v677, %v673
    %v902 = vpack.c.b16 %v678, %v674
    %v903 = vpack.c.b16 %v679, %v675
    %v904 = vpack.c.b16 %v680, %v676
    %v905 = vpack.c.b16 %v685, %v681
    %v906 = vpack.c.b16 %v686, %v682
    %v907 = vpack.c.b16 %v687, %v683
    %v908 = vpack.c.b16 %v688, %v684
    %v909 = vpack.c.b16 %v693, %v689
    %v910 = vpack.c.b16 %v694, %v690
    %v911 = vpack.c.b16 %v695, %v691
    %v912 = vpack.c.b16 %v696, %v692
    %v913 = vpack.c.b16 %v701, %v697
    %v914 = vpack.c.b16 %v702, %v698
    %v915 = vpack.c.b16 %v703, %v699
    %v916 = vpack.c.b16 %v704, %v700
    %v917 = vpack.c.b16 %v709, %v705
    %v918 = vpack.c.b16 %v710, %v706
    %v919 = vpack.c.b16 %v711, %v707
    %v920 = vpack.c.b16 %v712, %v708
    %v921 = vpack.c.b16 %v717, %v713
    %v922 = vpack.c.b16 %v718, %v714
    %v923 = vpack.c.b16 %v719, %v715
    %v924 = vpack.c.b16 %v720, %v716
    %v925 = vpack.c.b16 %v725, %v721
    %v926 = vpack.c.b16 %v726, %v722
    %v927 = vpack.c.b16 %v727, %v723
    %v928 = vpack.c.b16 %v728, %v724
    %v929 = vpack.c.b16 %v733, %v729
    %v930 = vpack.c.b16 %v734, %v730
    %v931 = vpack.c.b16 %v735, %v731
    %v932 = vpack.c.b16 %v736, %v732
    %v933 = vpack.c.b16 %v741, %v737
    %v934 = vpack.c.b16 %v742, %v738
    %v935 = vpack.c.b16 %v743, %v739
    %v936 = vpack.c.b16 %v744, %v740
    %v937 = vpack.c.b16 %v749, %v745
    %v938 = vpack.c.b16 %v750, %v746
    %v939 = vpack.c.b16 %v751, %v747
    %v940 = vpack.c.b16 %v752, %v748
    %v941 = vpack.c.b16 %v757, %v753
    %v942 = vpack.c.b16 %v758, %v754
    %v943 = vpack.c.b16 %v759, %v755
    %v944 = vpack.c.b16 %v760, %v756
    %v945 = vpack.c.b16 %v765, %v761
    %v946 = vpack.c.b16 %v766, %v762
    %v947 = vpack.c.b16 %v767, %v763
    %v948 = vpack.c.b16 %v768, %v764
    %v949 = vpack.c.b16 %v773, %v769
    %v950 = vpack.c.b16 %v774, %v770
    %v951 = vpack.c.b16 %v775, %v771
    %v952 = vpack.c.b16 %v776, %v772
    %v953 = vpack.c.b16 %v781, %v777
    %v954 = vpack.c.b16 %v782, %v778
    %v955 = vpack.c.b16 %v783, %v779
    %v956 = vpack.c.b16 %v784, %v780
    %v957 = vpack.c.b16 %v789, %v785
    %v958 = vpack.c.b16 %v790, %v786
    %v959 = vpack.c.b16 %v791, %v787
    %v960 = vpack.c.b16 %v792, %v788
    %v961 = vpack.c.b16 %v797, %v793
    %v962 = vpack.c.b16 %v798, %v794
    %v963 = vpack.c.b16 %v799, %v795
    %v964 = vpack.c.b16 %v800, %v796
    %v965 = vpack.c.b16 %v805, %v801
    %v966 = vpack.c.b16 %v806, %v802
    %v967 = vpack.c.b16 %v807, %v803
    %v968 = vpack.c.b16 %v808, %v804
    %v969 = vpack.c.b16 %v813, %v809
    %v970 = vpack.c.b16 %v814, %v810
    %v971 = vpack.c.b16 %v815, %v811
    %v972 = vpack.c.b16 %v816, %v812
    %v973 = vpack.c.b16 %v821, %v817
    %v974 = vpack.c.b16 %v822, %v818
    %v975 = vpack.c.b16 %v823, %v819
    %v976 = vpack.c.b16 %v824, %v820
    %v977 = vpack.c.b16 %v829, %v825
    %v978 = vpack.c.b16 %v830, %v826
    %v979 = vpack.c.b16 %v831, %v827
    %v980 = vpack.c.b16 %v832, %v828
    %v981 = vpack.c.b16 %v837, %v833
    %v982 = vpack.c.b16 %v838, %v834
    %v983 = vpack.c.b16 %v839, %v835
    %v984 = vpack.c.b16 %v840, %v836
    %v985 = vpack.c.b16 %v845, %v841
    %v986 = vpack.c.b16 %v846, %v842
    %v987 = vpack.c.b16 %v847, %v843
    %v988 = vpack.c.b16 %v848, %v844
    %v989 = vpack.c.b16 %v853, %v849
    %v990 = vpack.c.b16 %v854, %v850
    %v991 = vpack.c.b16 %v855, %v851
    %v992 = vpack.c.b16 %v856, %v852
    %v993 = vpack.c.b16 %v861, %v857
    %v994 = vpack.c.b16 %v862, %v858
    %v995 = vpack.c.b16 %v863, %v859
    %v996 = vpack.c.b16 %v864, %v860
    %v997 = vpack.c.b16 %v869, %v865
    %v998 = vpack.c.b16 %v870, %v866
    %v999 = vpack.c.b16 %v871, %v867
    %v1000 = vpack.c.b16 %v872, %v868
    %1129 = vmatpush.bf16.msra.mxu0 %v901
    %1130 = vmatpush.bf16.msra.mxu0 %v897
    %1131 = vmatpush.bf16.msra.mxu0 %v893
    %1132 = vmatpush.bf16.msra.mxu0 %v889
    %1133 = vmatpush.bf16.msra.mxu0 %v885
    %1134 = vmatpush.bf16.msra.mxu0 %v881
    %1135 = vmatpush.bf16.msra.mxu0 %v877
    %1136 = vmatpush.bf16.msra.mxu0 %v873
    %1137 = vmatmul.bf16.gmra.mxu0 %v347
    %v1138 = vpop.f32.mrf.mxu0
    %v1139 = vadd.f32 %v481, %v1138
    %v1140 = vpop.f32.mrf.mxu0
    %v1141 = vadd.f32 %v481, %v1140
    %1142 = vdwg.mxu0
    %1143 = vmatpush.bf16.msra.mxu0 %v933
    %1144 = vmatpush.bf16.msra.mxu0 %v929
    %1145 = vmatpush.bf16.msra.mxu0 %v925
    %1146 = vmatpush.bf16.msra.mxu0 %v921
    %1147 = vmatpush.bf16.msra.mxu0 %v917
    %1148 = vmatpush.bf16.msra.mxu0 %v913
    %1149 = vmatpush.bf16.msra.mxu0 %v909
    %1150 = vmatpush.bf16.msra.mxu0 %v905
    %1151 = vmatmul.bf16.gmra.mxu0 %v348
    %v1152 = vpop.f32.mrf.mxu0
    %v1153 = vadd.f32 %v1139, %v1152
    %v1154 = vpop.f32.mrf.mxu0
    %v1155 = vadd.f32 %v1141, %v1154
    %1156 = vdwg.mxu0
    %1157 = vmatpush.bf16.msra.mxu0 %v965
    %1158 = vmatpush.bf16.msra.mxu0 %v961
    %1159 = vmatpush.bf16.msra.mxu0 %v957
    %1160 = vmatpush.bf16.msra.mxu0 %v953
    %1161 = vmatpush.bf16.msra.mxu0 %v949
    %1162 = vmatpush.bf16.msra.mxu0 %v945
    %1163 = vmatpush.bf16.msra.mxu0 %v941
    %1164 = vmatpush.bf16.msra.mxu0 %v937
    %1165 = vmatmul.bf16.gmra.mxu0 %v349
    %v1166 = vpop.f32.mrf.mxu0
    %v1167 = vadd.f32 %v1153, %v1166
    %v1168 = vpop.f32.mrf.mxu0
    %v1169 = vadd.f32 %v1155, %v1168
    %1170 = vdwg.mxu0
    %1171 = vmatpush.bf16.msra.mxu0 %v997
    %1172 = vmatpush.bf16.msra.mxu0 %v993
    %1173 = vmatpush.bf16.msra.mxu0 %v989
    %1174 = vmatpush.bf16.msra.mxu0 %v985
    %1175 = vmatpush.bf16.msra.mxu0 %v981
    %1176 = vmatpush.bf16.msra.mxu0 %v977
    %1177 = vmatpush.bf16.msra.mxu0 %v973
    %1178 = vmatpush.bf16.msra.mxu0 %v969
    %1179 = vmatmul.bf16.gmra.mxu0 %v350
    %v1180 = vpop.f32.mrf.mxu0
    %v1181 = vadd.f32 %v1167, %v1180
    %v1182 = vpop.f32.mrf.mxu0
    %v1183 = vadd.f32 %v1169, %v1182
    %1184 = vdwg.mxu0
    %1185 = vmatpush.bf16.msra.mxu0 %v902
    %1186 = vmatpush.bf16.msra.mxu0 %v898
    %1187 = vmatpush.bf16.msra.mxu0 %v894
    %1188 = vmatpush.bf16.msra.mxu0 %v890
    %1189 = vmatpush.bf16.msra.mxu0 %v886
    %1190 = vmatpush.bf16.msra.mxu0 %v882
    %1191 = vmatpush.bf16.msra.mxu0 %v878
    %1192 = vmatpush.bf16.msra.mxu0 %v874
    %1193 = vmatmul.bf16.gmra.mxu0 %v347
    %v1194 = vpop.f32.mrf.mxu0
    %v1195 = vadd.f32 %v482, %v1194
    %v1196 = vpop.f32.mrf.mxu0
    %v1197 = vadd.f32 %v482, %v1196
    %1198 = vdwg.mxu0
    %1199 = vmatpush.bf16.msra.mxu0 %v934
    %1200 = vmatpush.bf16.msra.mxu0 %v930
    %1201 = vmatpush.bf16.msra.mxu0 %v926
    %1202 = vmatpush.bf16.msra.mxu0 %v922
    %1203 = vmatpush.bf16.msra.mxu0 %v918
    %1204 = vmatpush.bf16.msra.mxu0 %v914
    %1205 = vmatpush.bf16.msra.mxu0 %v910
    %1206 = vmatpush.bf16.msra.mxu0 %v906
    %1207 = vmatmul.bf16.gmra.mxu0 %v348
    %v1208 = vpop.f32.mrf.mxu0
    %v1209 = vadd.f32 %v1195, %v1208
    %v1210 = vpop.f32.mrf.mxu0
    %v1211 = vadd.f32 %v1197, %v1210
    %1212 = vdwg.mxu0
    %1213 = vmatpush.bf16.msra.mxu0 %v966
    %1214 = vmatpush.bf16.msra.mxu0 %v962
    %1215 = vmatpush.bf16.msra.mxu0 %v958
    %1216 = vmatpush.bf16.msra.mxu0 %v954
    %1217 = vmatpush.bf16.msra.mxu0 %v950
    %1218 = vmatpush.bf16.msra.mxu0 %v946
    %1219 = vmatpush.bf16.msra.mxu0 %v942
    %1220 = vmatpush.bf16.msra.mxu0 %v938
    %1221 = vmatmul.bf16.gmra.mxu0 %v349
    %v1222 = vpop.f32.mrf.mxu0
    %v1223 = vadd.f32 %v1209, %v1222
    %v1224 = vpop.f32.mrf.mxu0
    %v1225 = vadd.f32 %v1211, %v1224
    %1226 = vdwg.mxu0
    %1227 = vmatpush.bf16.msra.mxu0 %v998
    %1228 = vmatpush.bf16.msra.mxu0 %v994
    %1229 = vmatpush.bf16.msra.mxu0 %v990
    %1230 = vmatpush.bf16.msra.mxu0 %v986
    %1231 = vmatpush.bf16.msra.mxu0 %v982
    %1232 = vmatpush.bf16.msra.mxu0 %v978
    %1233 = vmatpush.bf16.msra.mxu0 %v974
    %1234 = vmatpush.bf16.msra.mxu0 %v970
    %1235 = vmatmul.bf16.gmra.mxu0 %v350
    %v1236 = vpop.f32.mrf.mxu0
    %v1237 = vadd.f32 %v1223, %v1236
    %v1238 = vpop.f32.mrf.mxu0
    %v1239 = vadd.f32 %v1225, %v1238
    %1240 = vdwg.mxu0
    %1241 = vmatpush.bf16.msra.mxu0 %v903
    %1242 = vmatpush.bf16.msra.mxu0 %v899
    %1243 = vmatpush.bf16.msra.mxu0 %v895
    %1244 = vmatpush.bf16.msra.mxu0 %v891
    %1245 = vmatpush.bf16.msra.mxu0 %v887
    %1246 = vmatpush.bf16.msra.mxu0 %v883
    %1247 = vmatpush.bf16.msra.mxu0 %v879
    %1248 = vmatpush.bf16.msra.mxu0 %v875
    %1249 = vmatmul.bf16.gmra.mxu0 %v347
    %v1250 = vpop.f32.mrf.mxu0
    %v1251 = vadd.f32 %v483, %v1250
    %v1252 = vpop.f32.mrf.mxu0
    %v1253 = vadd.f32 %v483, %v1252
    %1254 = vdwg.mxu0
    %1255 = vmatpush.bf16.msra.mxu0 %v935
    %1256 = vmatpush.bf16.msra.mxu0 %v931
    %1257 = vmatpush.bf16.msra.mxu0 %v927
    %1258 = vmatpush.bf16.msra.mxu0 %v923
    %1259 = vmatpush.bf16.msra.mxu0 %v919
    %1260 = vmatpush.bf16.msra.mxu0 %v915
    %1261 = vmatpush.bf16.msra.mxu0 %v911
    %1262 = vmatpush.bf16.msra.mxu0 %v907
    %1263 = vmatmul.bf16.gmra.mxu0 %v348
    %v1264 = vpop.f32.mrf.mxu0
    %v1265 = vadd.f32 %v1251, %v1264
    %v1266 = vpop.f32.mrf.mxu0
    %v1267 = vadd.f32 %v1253, %v1266
    %1268 = vdwg.mxu0
    %1269 = vmatpush.bf16.msra.mxu0 %v967
    %1270 = vmatpush.bf16.msra.mxu0 %v963
    %1271 = vmatpush.bf16.msra.mxu0 %v959
    %1272 = vmatpush.bf16.msra.mxu0 %v955
    %1273 = vmatpush.bf16.msra.mxu0 %v951
    %1274 = vmatpush.bf16.msra.mxu0 %v947
    %1275 = vmatpush.bf16.msra.mxu0 %v943
    %1276 = vmatpush.bf16.msra.mxu0 %v939
    %1277 = vmatmul.bf16.gmra.mxu0 %v349
    %v1278 = vpop.f32.mrf.mxu0
    %v1279 = vadd.f32 %v1265, %v1278
    %v1280 = vpop.f32.mrf.mxu0
    %v1281 = vadd.f32 %v1267, %v1280
    %1282 = vdwg.mxu0
    %1283 = vmatpush.bf16.msra.mxu0 %v999
    %1284 = vmatpush.bf16.msra.mxu0 %v995
    %1285 = vmatpush.bf16.msra.mxu0 %v991
    %1286 = vmatpush.bf16.msra.mxu0 %v987
    %1287 = vmatpush.bf16.msra.mxu0 %v983
    %1288 = vmatpush.bf16.msra.mxu0 %v979
    %1289 = vmatpush.bf16.msra.mxu0 %v975
    %1290 = vmatpush.bf16.msra.mxu0 %v971
    %1291 = vmatmul.bf16.gmra.mxu0 %v350
    %v1292 = vpop.f32.mrf.mxu0
    %v1293 = vadd.f32 %v1279, %v1292
    %v1294 = vpop.f32.mrf.mxu0
    %v1295 = vadd.f32 %v1281, %v1294
    %1296 = vdwg.mxu0
    %1297 = vmatpush.bf16.msra.mxu0 %v904
    %1298 = vmatpush.bf16.msra.mxu0 %v900
    %1299 = vmatpush.bf16.msra.mxu0 %v896
    %1300 = vmatpush.bf16.msra.mxu0 %v892
    %1301 = vmatpush.bf16.msra.mxu0 %v888
    %1302 = vmatpush.bf16.msra.mxu0 %v884
    %1303 = vmatpush.bf16.msra.mxu0 %v880
    %1304 = vmatpush.bf16.msra.mxu0 %v876
    %1305 = vmatmul.bf16.gmra.mxu0 %v347
    %v1306 = vpop.f32.mrf.mxu0
    %v1307 = vadd.f32 %v484, %v1306
    %v1308 = vpop.f32.mrf.mxu0
    %v1309 = vadd.f32 %v484, %v1308
    %1310 = vdwg.mxu0
    %1311 = vmatpush.bf16.msra.mxu0 %v936
    %1312 = vmatpush.bf16.msra.mxu0 %v932
    %1313 = vmatpush.bf16.msra.mxu0 %v928
    %1314 = vmatpush.bf16.msra.mxu0 %v924
    %1315 = vmatpush.bf16.msra.mxu0 %v920
    %1316 = vmatpush.bf16.msra.mxu0 %v916
    %1317 = vmatpush.bf16.msra.mxu0 %v912
    %1318 = vmatpush.bf16.msra.mxu0 %v908
    %1319 = vmatmul.bf16.gmra.mxu0 %v348
    %v1320 = vpop.f32.mrf.mxu0
    %v1321 = vadd.f32 %v1307, %v1320
    %v1322 = vpop.f32.mrf.mxu0
    %v1323 = vadd.f32 %v1309, %v1322
    %1324 = vdwg.mxu0
    %1325 = vmatpush.bf16.msra.mxu0 %v968
    %1326 = vmatpush.bf16.msra.mxu0 %v964
    %1327 = vmatpush.bf16.msra.mxu0 %v960
    %1328 = vmatpush.bf16.msra.mxu0 %v956
    %1329 = vmatpush.bf16.msra.mxu0 %v952
    %1330 = vmatpush.bf16.msra.mxu0 %v948
    %1331 = vmatpush.bf16.msra.mxu0 %v944
    %1332 = vmatpush.bf16.msra.mxu0 %v940
    %1333 = vmatmul.bf16.gmra.mxu0 %v349
    %v1334 = vpop.f32.mrf.mxu0
    %v1335 = vadd.f32 %v1321, %v1334
    %v1336 = vpop.f32.mrf.mxu0
    %v1337 = vadd.f32 %v1323, %v1336
    %1338 = vdwg.mxu0
    %1339 = vmatpush.bf16.msra.mxu0 %v1000
    %1340 = vmatpush.bf16.msra.mxu0 %v996
    %1341 = vmatpush.bf16.msra.mxu0 %v992
    %1342 = vmatpush.bf16.msra.mxu0 %v988
    %1343 = vmatpush.bf16.msra.mxu0 %v984
    %1344 = vmatpush.bf16.msra.mxu0 %v980
    %1345 = vmatpush.bf16.msra.mxu0 %v976
    %1346 = vmatpush.bf16.msra.mxu0 %v972
    %1347 = vmatmul.bf16.gmra.mxu0 %v350
    %v1348 = vpop.f32.mrf.mxu0
    %v1349 = vadd.f32 %v1335, %v1348
    %v1350 = vpop.f32.mrf.mxu0
    %v1351 = vadd.f32 %v1337, %v1350
    %1352 = vdwg.mxu0
    %v1353 = vmax.f32 %v1181, 0.0
    %v1354 = vmax.f32 %v1237, 0.0
    %v1355 = vmax.f32 %v1293, 0.0
    %v1356 = vmax.f32 %v1349, 0.0
    %v1357 = vmax.f32 %v1183, 0.0
    %v1358 = vmax.f32 %v1239, 0.0
    %v1359 = vmax.f32 %v1295, 0.0
    %v1360 = vmax.f32 %v1351, 0.0
    %v1361 = vpack.c.bf16 %v1357, %v1353
    %v1362 = vpack.c.bf16 %v1358, %v1354
    %v1363 = vpack.c.bf16 %v1359, %v1355
    %v1364 = vpack.c.bf16 %v1360, %v1356
    %v1365 = vld [vmem:[#allocation11] sm:$0xf]
    %v1366 = vld [vmem:[#allocation11 + $0x4] sm:$0xf]
    %v1367 = vld [vmem:[#allocation11 + $0x8] sm:$0xf]
    %v1368 = vld [vmem:[#allocation11 + $0xc] sm:$0xf]
    %v1369 = vld [vmem:[#allocation11 + $0x10] sm:$0xf]
    %v1370 = vld [vmem:[#allocation11 + $0x14] sm:$0xf]
    %v1371 = vld [vmem:[#allocation11 + $0x18] sm:$0xf]
    %v1372 = vld [vmem:[#allocation11 + $0x1c] sm:$0xf]
    %v1373 = vld [vmem:[#allocation11 + $0x20] sm:$0xf]
    %v1374 = vld [vmem:[#allocation11 + $0x24] sm:$0xf]
    %v1375 = vld [vmem:[#allocation11 + $0x28] sm:$0xf]
    %v1376 = vld [vmem:[#allocation11 + $0x2c] sm:$0xf]
    %v1377 = vld [vmem:[#allocation11 + $0x30] sm:$0xf]
    %v1378 = vld [vmem:[#allocation11 + $0x34] sm:$0xf]
    %v1379 = vld [vmem:[#allocation11 + $0x38] sm:$0xf]
    %v1380 = vld [vmem:[#allocation11 + $0x3c] sm:$0xf]
    %v1381 = vld [vmem:[#allocation11 + $0x40] sm:$0xf]
    %v1382 = vld [vmem:[#allocation11 + $0x44] sm:$0xf]
    %v1383 = vld [vmem:[#allocation11 + $0x48] sm:$0xf]
    %v1384 = vld [vmem:[#allocation11 + $0x4c] sm:$0xf]
    %v1385 = vld [vmem:[#allocation11 + $0x50] sm:$0xf]
    %v1386 = vld [vmem:[#allocation11 + $0x54] sm:$0xf]
    %v1387 = vld [vmem:[#allocation11 + $0x58] sm:$0xf]
    %v1388 = vld [vmem:[#allocation11 + $0x5c] sm:$0xf]
    %v1389 = vld [vmem:[#allocation11 + $0x60] sm:$0xf]
    %v1390 = vld [vmem:[#allocation11 + $0x64] sm:$0xf]
    %v1391 = vld [vmem:[#allocation11 + $0x68] sm:$0xf]
    %v1392 = vld [vmem:[#allocation11 + $0x6c] sm:$0xf]
    %v1393 = vld [vmem:[#allocation11 + $0x70] sm:$0xf]
    %v1394 = vld [vmem:[#allocation11 + $0x74] sm:$0xf]
    %v1395 = vld [vmem:[#allocation11 + $0x78] sm:$0xf]
    %v1396 = vld [vmem:[#allocation11 + $0x7c] sm:$0xf]
    %v1397 = vld [vmem:[#allocation11 + $0x80] sm:$0xf]
    %v1398 = vld [vmem:[#allocation11 + $0x84] sm:$0xf]
    %v1399 = vld [vmem:[#allocation11 + $0x88] sm:$0xf]
    %v1400 = vld [vmem:[#allocation11 + $0x8c] sm:$0xf]
    %v1401 = vld [vmem:[#allocation11 + $0x90] sm:$0xf]
    %v1402 = vld [vmem:[#allocation11 + $0x94] sm:$0xf]
    %v1403 = vld [vmem:[#allocation11 + $0x98] sm:$0xf]
    %v1404 = vld [vmem:[#allocation11 + $0x9c] sm:$0xf]
    %v1405 = vld [vmem:[#allocation11 + $0xa0] sm:$0xf]
    %v1406 = vld [vmem:[#allocation11 + $0xa4] sm:$0xf]
    %v1407 = vld [vmem:[#allocation11 + $0xa8] sm:$0xf]
    %v1408 = vld [vmem:[#allocation11 + $0xac] sm:$0xf]
    %v1409 = vld [vmem:[#allocation11 + $0xb0] sm:$0xf]
    %v1410 = vld [vmem:[#allocation11 + $0xb4] sm:$0xf]
    %v1411 = vld [vmem:[#allocation11 + $0xb8] sm:$0xf]
    %v1412 = vld [vmem:[#allocation11 + $0xbc] sm:$0xf]
    %v1413 = vld [vmem:[#allocation11 + $0xc0] sm:$0xf]
    %v1414 = vld [vmem:[#allocation11 + $0xc4] sm:$0xf]
    %v1415 = vld [vmem:[#allocation11 + $0xc8] sm:$0xf]
    %v1416 = vld [vmem:[#allocation11 + $0xcc] sm:$0xf]
    %v1417 = vld [vmem:[#allocation11 + $0xd0] sm:$0xf]
    %v1418 = vld [vmem:[#allocation11 + $0xd4] sm:$0xf]
    %v1419 = vld [vmem:[#allocation11 + $0xd8] sm:$0xf]
    %v1420 = vld [vmem:[#allocation11 + $0xdc] sm:$0xf]
    %v1421 = vld [vmem:[#allocation11 + $0xe0] sm:$0xf]
    %v1422 = vld [vmem:[#allocation11 + $0xe4] sm:$0xf]
    %v1423 = vld [vmem:[#allocation11 + $0xe8] sm:$0xf]
    %v1424 = vld [vmem:[#allocation11 + $0xec] sm:$0xf]
    %v1425 = vld [vmem:[#allocation11 + $0xf0] sm:$0xf]
    %v1426 = vld [vmem:[#allocation11 + $0xf4] sm:$0xf]
    %v1427 = vld [vmem:[#allocation11 + $0xf8] sm:$0xf]
    %v1428 = vld [vmem:[#allocation11 + $0xfc] sm:$0xf]
    %v1429 = vld [vmem:[%s6] sm:$0x1]
    %v1431 = vperm.slane %v1429, 0
    %v1497 = vunpack.c.l.b16 %v1365
    %v1498 = vunpack.c.l.b16 %v1366
    %v1499 = vunpack.c.l.b16 %v1367
    %v1500 = vunpack.c.l.b16 %v1368
    %v1501 = vunpack.c.l.b16 %v1369
    %v1502 = vunpack.c.l.b16 %v1370
    %v1503 = vunpack.c.l.b16 %v1371
    %v1504 = vunpack.c.l.b16 %v1372
    %v1505 = vunpack.c.l.b16 %v1373
    %v1506 = vunpack.c.l.b16 %v1374
    %v1507 = vunpack.c.l.b16 %v1375
    %v1508 = vunpack.c.l.b16 %v1376
    %v1509 = vunpack.c.l.b16 %v1377
    %v1510 = vunpack.c.l.b16 %v1378
    %v1511 = vunpack.c.l.b16 %v1379
    %v1512 = vunpack.c.l.b16 %v1380
    %v1513 = vunpack.c.l.b16 %v1381
    %v1514 = vunpack.c.l.b16 %v1382
    %v1515 = vunpack.c.l.b16 %v1383
    %v1516 = vunpack.c.l.b16 %v1384
    %v1517 = vunpack.c.l.b16 %v1385
    %v1518 = vunpack.c.l.b16 %v1386
    %v1519 = vunpack.c.l.b16 %v1387
    %v1520 = vunpack.c.l.b16 %v1388
    %v1521 = vunpack.c.l.b16 %v1389
    %v1522 = vunpack.c.l.b16 %v1390
    %v1523 = vunpack.c.l.b16 %v1391
    %v1524 = vunpack.c.l.b16 %v1392
    %v1525 = vunpack.c.l.b16 %v1393
    %v1526 = vunpack.c.l.b16 %v1394
    %v1527 = vunpack.c.l.b16 %v1395
    %v1528 = vunpack.c.l.b16 %v1396
    %v1529 = vunpack.c.l.b16 %v1397
    %v1530 = vunpack.c.l.b16 %v1398
    %v1531 = vunpack.c.l.b16 %v1399
    %v1532 = vunpack.c.l.b16 %v1400
    %v1533 = vunpack.c.l.b16 %v1401
    %v1534 = vunpack.c.l.b16 %v1402
    %v1535 = vunpack.c.l.b16 %v1403
    %v1536 = vunpack.c.l.b16 %v1404
    %v1537 = vunpack.c.l.b16 %v1405
    %v1538 = vunpack.c.l.b16 %v1406
    %v1539 = vunpack.c.l.b16 %v1407
    %v1540 = vunpack.c.l.b16 %v1408
    %v1541 = vunpack.c.l.b16 %v1409
    %v1542 = vunpack.c.l.b16 %v1410
    %v1543 = vunpack.c.l.b16 %v1411
    %v1544 = vunpack.c.l.b16 %v1412
    %v1545 = vunpack.c.l.b16 %v1413
    %v1546 = vunpack.c.l.b16 %v1414
    %v1547 = vunpack.c.l.b16 %v1415
    %v1548 = vunpack.c.l.b16 %v1416
    %v1549 = vunpack.c.l.b16 %v1417
    %v1550 = vunpack.c.l.b16 %v1418
    %v1551 = vunpack.c.l.b16 %v1419
    %v1552 = vunpack.c.l.b16 %v1420
    %v1553 = vunpack.c.l.b16 %v1421
    %v1554 = vunpack.c.l.b16 %v1422
    %v1555 = vunpack.c.l.b16 %v1423
    %v1556 = vunpack.c.l.b16 %v1424
    %v1557 = vunpack.c.l.b16 %v1425
    %v1558 = vunpack.c.l.b16 %v1426
    %v1559 = vunpack.c.l.b16 %v1427
    %v1560 = vunpack.c.l.b16 %v1428
    %v1561 = vpack.c.b16 %v1498, %v1497
    %v1562 = vpack.c.b16 %v1500, %v1499
    %v1563 = vpack.c.b16 %v1502, %v1501
    %v1564 = vpack.c.b16 %v1504, %v1503
    %v1565 = vpack.c.b16 %v1506, %v1505
    %v1566 = vpack.c.b16 %v1508, %v1507
    %v1567 = vpack.c.b16 %v1510, %v1509
    %v1568 = vpack.c.b16 %v1512, %v1511
    %v1569 = vpack.c.b16 %v1514, %v1513
    %v1570 = vpack.c.b16 %v1516, %v1515
    %v1571 = vpack.c.b16 %v1518, %v1517
    %v1572 = vpack.c.b16 %v1520, %v1519
    %v1573 = vpack.c.b16 %v1522, %v1521
    %v1574 = vpack.c.b16 %v1524, %v1523
    %v1575 = vpack.c.b16 %v1526, %v1525
    %v1576 = vpack.c.b16 %v1528, %v1527
    %v1577 = vpack.c.b16 %v1530, %v1529
    %v1578 = vpack.c.b16 %v1532, %v1531
    %v1579 = vpack.c.b16 %v1534, %v1533
    %v1580 = vpack.c.b16 %v1536, %v1535
    %v1581 = vpack.c.b16 %v1538, %v1537
    %v1582 = vpack.c.b16 %v1540, %v1539
    %v1583 = vpack.c.b16 %v1542, %v1541
    %v1584 = vpack.c.b16 %v1544, %v1543
    %v1585 = vpack.c.b16 %v1546, %v1545
    %v1586 = vpack.c.b16 %v1548, %v1547
    %v1587 = vpack.c.b16 %v1550, %v1549
    %v1588 = vpack.c.b16 %v1552, %v1551
    %v1589 = vpack.c.b16 %v1554, %v1553
    %v1590 = vpack.c.b16 %v1556, %v1555
    %v1591 = vpack.c.b16 %v1558, %v1557
    %v1592 = vpack.c.b16 %v1560, %v1559
    %1625 = vmatpush.bf16.msra.mxu0 %v1568
    %1626 = vmatpush.bf16.msra.mxu0 %v1567
    %1627 = vmatpush.bf16.msra.mxu0 %v1566
    %1628 = vmatpush.bf16.msra.mxu0 %v1565
    %1629 = vmatpush.bf16.msra.mxu0 %v1564
    %1630 = vmatpush.bf16.msra.mxu0 %v1563
    %1631 = vmatpush.bf16.msra.mxu0 %v1562
    %1632 = vmatpush.bf16.msra.mxu0 %v1561
    %1633 = vmatmul.bf16.gmra.mxu0 %v1361
    %v1634 = vpop.f32.mrf.mxu0
    %v1635 = vadd.f32 %v1431, %v1634
    %v1636 = vpop.f32.mrf.mxu0
    %v1637 = vadd.f32 %v1431, %v1636
    %1638 = vdwg.mxu0
    %1639 = vmatpush.bf16.msra.mxu0 %v1576
    %1640 = vmatpush.bf16.msra.mxu0 %v1575
    %1641 = vmatpush.bf16.msra.mxu0 %v1574
    %1642 = vmatpush.bf16.msra.mxu0 %v1573
    %1643 = vmatpush.bf16.msra.mxu0 %v1572
    %1644 = vmatpush.bf16.msra.mxu0 %v1571
    %1645 = vmatpush.bf16.msra.mxu0 %v1570
    %1646 = vmatpush.bf16.msra.mxu0 %v1569
    %1647 = vmatmul.bf16.gmra.mxu0 %v1362
    %v1648 = vpop.f32.mrf.mxu0
    %v1649 = vadd.f32 %v1635, %v1648
    %v1650 = vpop.f32.mrf.mxu0
    %v1651 = vadd.f32 %v1637, %v1650
    %1652 = vdwg.mxu0
    %1653 = vmatpush.bf16.msra.mxu0 %v1584
    %1654 = vmatpush.bf16.msra.mxu0 %v1583
    %1655 = vmatpush.bf16.msra.mxu0 %v1582
    %1656 = vmatpush.bf16.msra.mxu0 %v1581
    %1657 = vmatpush.bf16.msra.mxu0 %v1580
    %1658 = vmatpush.bf16.msra.mxu0 %v1579
    %1659 = vmatpush.bf16.msra.mxu0 %v1578
    %1660 = vmatpush.bf16.msra.mxu0 %v1577
    %1661 = vmatmul.bf16.gmra.mxu0 %v1363
    %v1662 = vpop.f32.mrf.mxu0
    %v1663 = vadd.f32 %v1649, %v1662
    %v1664 = vpop.f32.mrf.mxu0
    %v1665 = vadd.f32 %v1651, %v1664
    %1666 = vdwg.mxu0
    %1667 = vmatpush.bf16.msra.mxu0 %v1592
    %1668 = vmatpush.bf16.msra.mxu0 %v1591
    %1669 = vmatpush.bf16.msra.mxu0 %v1590
    %1670 = vmatpush.bf16.msra.mxu0 %v1589
    %1671 = vmatpush.bf16.msra.mxu0 %v1588
    %1672 = vmatpush.bf16.msra.mxu0 %v1587
    %1673 = vmatpush.bf16.msra.mxu0 %v1586
    %1674 = vmatpush.bf16.msra.mxu0 %v1585
    %1675 = vmatmul.bf16.gmra.mxu0 %v1364
    %v1676 = vpop.f32.mrf.mxu0
    %v1677 = vadd.f32 %v1663, %v1676
    %v1678 = vpop.f32.mrf.mxu0
    %v1679 = vadd.f32 %v1665, %v1678
    %1680 = vdwg.mxu0
    %v1681 = vpack.c.bf16 %v1677, %v1677
    %v1682 = vpack.c.bf16 %v1679, %v1679
    %1683 = vst [vmem:[#allocation13] sm:$0xf] %v1681
    %1684 = vst [vmem:[#allocation13 + $0x4] sm:$0xf] %v1682
    // Predicated region
    $region54: #{tpu_custom_call.1} parent=1 // pred_check
      _
    $region55: #{tpu_custom_call.1} parent=1 // pred_check_branch
      %1686 = sbr.rel (0) target = $region57
    $region56: #{tpu_custom_call.1} parent=1 // pred_region
      %1688 = vsyncadd [#allocation4], 0
      %s1689 = sshll.u32 [#allocation13], 4
      %s1690 = int_to_ptr.vmem [resolvable:$true] %s1689
      %s1691 = sshll.u32 %s7, 4
      %s1692 = int_to_ptr.hbm [resolvable:$true] %s1691
      %1697 = dma.vmem_to_hbm [thread:$0]  %s1690, 128, %s1692, [#allocation4], 64, 64, 4
    $region57: #{tpu_custom_call.1} parent=1 // pred_fallthru
      _
    // Predicated region
    $region58: #{tpu_custom_call.1} parent=1 // pred_check
      _
    $region59: #{tpu_custom_call.1} parent=1 // pred_check_branch
      %1699 = sbr.rel (0) target = $region61
    $region60: #{tpu_custom_call.1} parent=1 // pred_region
      %1701 = dma.done [#allocation4], 128
    $region61: #{tpu_custom_call.1} parent=1 // pred_fallthru
      _
    %1702 = vsyncpa [#allocation3], 1
    %1703 = vsyncpa [#allocation6], 1
    %1704 = vsyncpa [#allocation9], 1
    %1705 = vsyncpa [#allocation12], 1
    %1706 = vsyncpa [#allocation4], 1

</llo_original>
